<compile_context>
chip_gen: v7x
topology: tpu7x:2x2x1
jax: 0.10.0
libtpu: 0.0.40
codegen_flags: <defaults>
</compile_context>

<pallas_src>
import math

import jax
import jax.numpy as jnp
import numpy as np
from jax import lax
from jax.experimental import pallas as pl
from jax.experimental.pallas import tpu as pltpu


def split_layer(total_channels, num_groups):
    split = [int(np.ceil(total_channels / num_groups)) for _ in range(num_groups)]
    split[num_groups - 1] += total_channels - sum(split)
    return split


_HIGHEST = jax.lax.Precision.HIGHEST


def _choose_m_tile(M):
    """Large, sublane-aligned (multiple of 8) M tile with >=2 grid blocks when possible."""
    if M <= 8:
        return M
    return int(min(512, max(8, ((M // 2) // 8) * 8)))


def _pointwise_grouped_conv(x_nhwc, w_fused, bias):
    """kernel_size == 1, stride == 1: grouped 1x1 conv as one fused tiled matmul."""
    N, H, W, Cin = x_nhwc.shape
    Cout = w_fused.shape[-1]
    M = N * H * W
    x2d = x_nhwc.reshape(M, Cin)          # free reshape: C already minor-most (lanes)
    w2d = w_fused.reshape(Cin, Cout)
    b2d = bias.reshape(1, Cout)

    TM = _choose_m_tile(M)

    def kernel(x_ref, w_ref, b_ref, o_ref):
        acc = jnp.dot(
            x_ref[...].astype(jnp.float32),
            w_ref[...].astype(jnp.float32),
            preferred_element_type=jnp.float32,
            precision=_HIGHEST,
        )
        acc = acc + b_ref[...].astype(jnp.float32)
        o_ref[...] = acc.astype(o_ref.dtype)

    out = pl.pallas_call(
        kernel,
        out_shape=jax.ShapeDtypeStruct((M, Cout), x2d.dtype),
        grid_spec=pl.GridSpec(
            grid=(pl.cdiv(M, TM),),
            in_specs=[
                pl.BlockSpec((TM, Cin), lambda m: (m, 0)),
                pl.BlockSpec((Cin, Cout), lambda m: (0, 0)),  # resident weight
                pl.BlockSpec((1, Cout), lambda m: (0, 0)),    # resident bias
            ],
            out_specs=pl.BlockSpec((TM, Cout), lambda m: (m, 0)),
        ),
        compiler_params=pltpu.CompilerParams(dimension_semantics=("parallel",)),
    )(x2d, w2d, b2d)
    return out.reshape(N, H, W, Cout)


def _general_grouped_conv(x_nhwc, w_fused, bias, k, stride):
    """General kernel_size / stride path. One full (pre-padded) image per grid step."""
    N, Hp, Wp, Cin = x_nhwc.shape
    Cout = w_fused.shape[-1]
    Ho = (Hp - k) // stride + 1
    Wo = (Wp - k) // stride + 1
    b2d = bias.reshape(1, Cout)

    def kernel(x_ref, w_ref, b_ref, o_ref):
        acc = jnp.zeros((Ho * Wo, Cout), jnp.float32)
        for ki in range(k):                      # static tap unroll
            for kj in range(k):
                if stride == 1:
                    h_ix = pl.ds(ki, Ho)
                    w_ix = pl.ds(kj, Wo)
                else:
                    # stride only on H/W (sublane / outer dims), never on lanes
                    h_ix = pl.ds(ki, Ho, stride)
                    w_ix = pl.ds(kj, Wo, stride)
                win = x_ref[0, h_ix, w_ix, :]    # (Ho, Wo, Cin), channels on lanes
                acc = acc + jnp.dot(
                    win.reshape(Ho * Wo, Cin).astype(jnp.float32),
                    w_ref[ki * k + kj].astype(jnp.float32),
                    preferred_element_type=jnp.float32,
                    precision=_HIGHEST,
                )
        acc = acc + b_ref[...].astype(jnp.float32)
        o_ref[0] = acc.reshape(Ho, Wo, Cout).astype(o_ref.dtype)

    return pl.pallas_call(
        kernel,
        out_shape=jax.ShapeDtypeStruct((N, Ho, Wo, Cout), x_nhwc.dtype),
        grid_spec=pl.GridSpec(
            grid=(N,),
            in_specs=[
                pl.BlockSpec((1, Hp, Wp, Cin), lambda n: (n, 0, 0, 0)),
                pl.BlockSpec((k * k, Cin, Cout), lambda n: (0, 0, 0)),  # resident
                pl.BlockSpec((1, Cout), lambda n: (0, 0)),              # resident
            ],
            out_specs=pl.BlockSpec((1, Ho, Wo, Cout), lambda n: (n, 0, 0, 0)),
        ),
        compiler_params=pltpu.CompilerParams(dimension_semantics=("parallel",)),
    )(x_nhwc, w_fused, b2d)


class GroupConv2DPallas:
    """JAX/Pallas equivalent of GroupConv2D(in_ch, out_ch, k, stride, padding, n_chunks, bias)."""

    def __init__(self, in_channels, out_channels, kernel_size=1, stride=1,
                 padding=0, n_chunks=1, bias=False, key=None):
        if key is None:
            key = jax.random.PRNGKey(0)
        self.n_chunks = n_chunks
        self.kernel_size = int(kernel_size)
        self.use_bias = bool(bias)
        self.split_in = split_layer(in_channels, n_chunks)
        self.split_out = split_layer(out_channels, n_chunks)
        # Guard degenerate splits (review note): split_layer yields <=0 channels when
        # n_chunks exceeds the channel count, which nn.Conv2d would reject anyway.
        assert all(c > 0 for c in self.split_in), self.split_in
        assert all(c > 0 for c in self.split_out), self.split_out

        if n_chunks == 1:
            self.stride = int(stride)
            self.padding = int(padding)
        else:
            # Grouped branch of the PyTorch module builds
            # nn.Conv2d(cin_g, cout_g, kernel_size, bias=bias): stride=1, padding=0.
            self.stride = 1
            self.padding = 0

        k = self.kernel_size
        self.group_weights = []   # per-group PyTorch OIHW weights (for the reference)
        biases = []
        for cin_g, cout_g in zip(self.split_in, self.split_out):
            key, kw, kb = jax.random.split(key, 3)
            bound = 1.0 / math.sqrt(cin_g * k * k)   # nn.Conv2d default init bound
            w = jax.random.uniform(kw, (cout_g, cin_g, k, k), dtype=jnp.float32,
                                   minval=-bound, maxval=bound)
            self.group_weights.append(w)
            if self.use_bias:
                biases.append(jax.random.uniform(kb, (cout_g,), dtype=jnp.float32,
                                                 minval=-bound, maxval=bound))
        self.bias = (jnp.concatenate(biases) if self.use_bias
                     else jnp.zeros((out_channels,), jnp.float32))

        # Fused block-diagonal weight (k*k, C_in, C_out): zero off-diagonal blocks
        # encode the group structure so every chunk runs in a single pallas_call.
        wf = jnp.zeros((k * k, in_channels, out_channels), jnp.float32)
        ci = co = 0
        for w, cin_g, cout_g in zip(self.group_weights, self.split_in, self.split_out):
            wt = jnp.transpose(w, (2, 3, 1, 0)).reshape(k * k, cin_g, cout_g)
            wf = wf.at[:, ci:ci + cin_g, co:co + cout_g].set(wt)
            ci += cin_g
            co += cout_g
        self.w_fused = wf

    def __call__(self, x):
        # TODO(synk): Quantization() is undefined in the provided source; identity here.
        x_nhwc = jnp.transpose(x, (0, 2, 3, 1))          # channels -> lane axis
        k, s, p = self.kernel_size, self.stride, self.padding
        if p > 0:
            # Only reachable for n_chunks == 1 with explicit padding (default configs
            # and the grouped branch never pad); single wrapper-side zero pad.
            x_nhwc = jnp.pad(x_nhwc, ((0, 0), (p, p), (p, p), (0, 0)))
        if k == 1 and s == 1:
            y_nhwc = _pointwise_grouped_conv(x_nhwc, self.w_fused, self.bias)
        else:
            y_nhwc = _general_grouped_conv(x_nhwc, self.w_fused, self.bias, k, s)
        return jnp.transpose(y_nhwc, (0, 3, 1, 2))       # back to NCHW


def _reference_groupconv(x, mod: GroupConv2DPallas):
    """Pure-JAX reference (per-group lax.conv + concat), mirrors the PyTorch forward."""
    outs = []
    ci = 0
    p = mod.padding
    for w, cin_g in zip(mod.group_weights, mod.split_in):
        xs = x[:, ci:ci + cin_g]
        y = lax.conv_general_dilated(
            xs, w,
            window_strides=(mod.stride, mod.stride),
            padding=[(p, p), (p, p)],
            dimension_numbers=("NCHW", "OIHW", "NCHW"),
            precision=_HIGHEST,
        )
        outs.append(y)
        ci += cin_g
    y = jnp.concatenate(outs, axis=1)
    if mod.use_bias:
        y = y + mod.bias.reshape(1, -1, 1, 1)
    return y


if __name__ == "__main__":
    root = jax.random.PRNGKey(0)
    kx, k1, k2, k3, kx3 = jax.random.split(root, 5)

    N, C_in, C_out, H, W = 2, 4, 8, 16, 16
    x = jax.random.normal(kx, (N, C_in, H, W), dtype=jnp.float32)

    # Case 1: grouped 1x1 conv (typical MixNet GroupConv2D config), n_chunks=2.
    m1 = GroupConv2DPallas(C_in, C_out, kernel_size=1, n_chunks=2, key=k1)
    y1 = jax.block_until_ready(m1(x))
    r1 = jax.block_until_ready(_reference_groupconv(x, m1))
    assert y1.shape == (N, C_out, H, W), y1.shape
    np.testing.assert_allclose(np.asarray(y1), np.asarray(r1), rtol=1e-4, atol=1e-4)

    # Case 2: n_chunks == 1 dense conv, k=3, stride=1, padding=1 (general tap path).
    m2 = GroupConv2DPallas(C_in, C_out, kernel_size=3, stride=1, padding=1,
                           n_chunks=1, key=k2)
    y2 = jax.block_until_ready(m2(x))
    r2 = jax.block_until_ready(_reference_groupconv(x, m2))
    assert y2.shape == (N, C_out, H, W), y2.shape
    np.testing.assert_allclose(np.asarray(y2), np.asarray(r2), rtol=1e-4, atol=1e-4)

    # Case 3: uneven channel splits + bias, grouped 1x1 conv, n_chunks=3.
    C_in3, C_out3 = 6, 10
    x3 = jax.random.normal(kx3, (N, C_in3, H, W), dtype=jnp.float32)
    m3 = GroupConv2DPallas(C_in3, C_out3, kernel_size=1, n_chunks=3, bias=True, key=k3)
    y3 = jax.block_until_ready(m3(x3))
    r3 = jax.block_until_ready(_reference_groupconv(x3, m3))
    assert y3.shape == (N, C_out3, H, W), y3.shape
    np.testing.assert_allclose(np.asarray(y3), np.asarray(r3), rtol=1e-4, atol=1e-4)

    print("KERNEL_OK")
</pallas_src>

<mosaic_0001>
module attributes {stable_mosaic.version = 11 : i64} {
  func.func @kernel(%arg0: i32, %arg1: memref<256x4xf32, #tpu.memory_space<vmem>>, %arg2: memref<4x8xf32, #tpu.memory_space<vmem>>, %arg3: memref<1x8xf32, #tpu.memory_space<vmem>>, %arg4: memref<256x8xf32, #tpu.memory_space<vmem>>) attributes {dimension_semantics = [#tpu.dimension_semantics<parallel>], iteration_bounds = array<i64: 2>, scalar_prefetch = 0 : i64, scratch_operands = 0 : i64, tpu.core_type = #tpu.core_type<tc>, window_params = [{transform_indices = @transform_0, window_bounds = array<i64: 256, 4>}, {pipeline_mode = #tpu.pipeline_mode<synchronous>, transform_indices = @transform_1, window_bounds = array<i64: 4, 8>}, {pipeline_mode = #tpu.pipeline_mode<synchronous>, transform_indices = @transform_2, window_bounds = array<i64: 1, 8>}, {transform_indices = @transform_3, window_bounds = array<i64: 256, 8>}]} {
    %c0 = arith.constant 0 : index
    %c0_0 = arith.constant 0 : index
    %0 = vector.load %arg1[%c0, %c0_0] : memref<256x4xf32, #tpu.memory_space<vmem>>, vector<256x4xf32>
    %c0_1 = arith.constant 0 : index
    %c0_2 = arith.constant 0 : index
    %1 = vector.load %arg2[%c0_1, %c0_2] : memref<4x8xf32, #tpu.memory_space<vmem>>, vector<4x8xf32>
    %cst = arith.constant dense<0.000000e+00> : vector<256x8xf32>
    %2 = tpu.matmul %0, %1, %cst {dimension_numbers = #tpu.dot_dimension_numbers<[1], [0], [0], [1], [0, 0, 1, 1], [], []>, precision = #tpu.contract_precision<fp32>} : vector<256x4xf32>, vector<4x8xf32>, vector<256x8xf32> -> vector<256x8xf32>
    %c0_3 = arith.constant 0 : index
    %c0_4 = arith.constant 0 : index
    %3 = vector.load %arg3[%c0_3, %c0_4] : memref<1x8xf32, #tpu.memory_space<vmem>>, vector<1x8xf32>
    %4 = vector.broadcast %3 : vector<1x8xf32> to vector<256x8xf32>
    %5 = arith.addf %2, %4 : vector<256x8xf32>
    %c0_5 = arith.constant 0 : index
    %c0_6 = arith.constant 0 : index
    %6 = vector.load %arg4[%c0_5, %c0_6] : memref<256x8xf32, #tpu.memory_space<vmem>>, vector<256x8xf32>
    tpu.vector_store %arg4[%c0_5, %c0_6], %5 {strides = array<i32>} : memref<256x8xf32, #tpu.memory_space<vmem>>, vector<256x8xf32>,
    return
  }
  func.func @transform_0(%arg0: i32) -> (i32, i32) {
    %c0_i32 = arith.constant 0 : i32
    %c0_i32_0 = arith.constant 0 : i32
    return %arg0, %c0_i32 : i32, i32
  }
  func.func @transform_1(%arg0: i32) -> (i32, i32) {
    %c0_i32 = arith.constant 0 : i32
    %c0_i32_0 = arith.constant 0 : i32
    %c0_i32_1 = arith.constant 0 : i32
    return %c0_i32, %c0_i32_0 : i32, i32
  }
  func.func @transform_2(%arg0: i32) -> (i32, i32) {
    %c0_i32 = arith.constant 0 : i32
    %c0_i32_0 = arith.constant 0 : i32
    %c0_i32_1 = arith.constant 0 : i32
    return %c0_i32, %c0_i32_0 : i32, i32
  }
  func.func @transform_3(%arg0: i32) -> (i32, i32) {
    %c0_i32 = arith.constant 0 : i32
    %c0_i32_0 = arith.constant 0 : i32
    return %arg0, %c0_i32 : i32, i32
  }
}

</mosaic_0001>

<llo_original>
// kernel: tpu_custom_call.1
$region0: #{tpu_custom_call.1}
  #allocation0 [shape = 'u32[]', space=smem, size = 0x4, offset = 0x4, fixed_abs, tag = 'smem constant byte address 0x4 - core index']
  #allocation1 [shape = 'u32[144,128]{1,0:T(1,128)}', space=vmem, size = 0x12000, scoped, tag = 'internal scratch']
  %s0 = inlined_call_operand.vmem [shape: f32[512,4], index: 0, kind: input, shape index: {}]
  %s1 = inlined_call_operand.vmem [shape: f32[4,8], index: 1, kind: input, shape index: {}]
  %s2 = inlined_call_operand.vmem [shape: f32[1,8], index: 2, kind: input, shape index: {}]
  %s3 = inlined_call_operand.vmem [shape: f32[512,8], index: 3, kind: output, shape index: {}]
  %s4 = sld [smem:[#allocation0]]
  $region45: #{tpu_custom_call.1} parent=0
    _
  %s6 = ssub.s32 1, %s4
  %s7 = scalar_select 0, %s6, %s4
  loop: start=0, step=1, limit=4
  $region2: #{tpu_custom_call.1} parent=0 // loop_pre_header
    _
  $region3: #{tpu_custom_call.1} parent=0 // loop_header
    %s9 = sphi 0, %s13
    %p10 = scmp.ge.s32.totalorder %s9, 4
    %s19 = sphi 0, %s21
    %s22 = sphi 0, %s19
    %s23 = sphi 0, %s22
    %s39 = sphi 0, %s23
    %s43 = sphi 0, %s43
    %s45 = sphi 0, %s43
    %s46 = sphi 0, %s45
    %s60 = sphi 0, %s46
    %s64 = sphi 0, %s64
    %s66 = sphi 0, %s64
    %s67 = sphi 0, %s66
    %s81 = sphi 0, %s67
    %s87 = sphi 0, %s89
    %s90 = sphi 0, %s87
    %s91 = sphi 0, %s90
    %s107 = sphi 0, %s91
  $region4: #{tpu_custom_call.1} parent=0 // loop_header_branch
    %12 = sbr.rel (%p10) target = $region8
  $region5: #{tpu_custom_call.1} parent=0 // loop_body
    %s14 = ssub.s32 %s9, 1
    %s15 = ssub.s32 %s9, 2
    %s16 = sadd.s32 %s9, 1
    %s17 = ssub.s32 %s9, %s16
    %p18 = scmp.eq.s32.totalorder %s17, 0
    %s20 = sadd.s32 %s19, 1
    %s21 = scalar_select %p18, %s19, %s20
    %p24 = pneg %p18
    %p25 = scmp.eq.s32.totalorder %s9, 1
    %p26 = por %p24, %p25
    %p27 = scmp.ne.s32.totalorder %s19, %s22
    %p28 = scmp.eq.s32.totalorder %s9, 0
    %p29 = por %p27, %p28
    %p30 = scmp.ne.s32.totalorder %s19, %s22
    %p31 = scmp.eq.s32.totalorder %s14, 1
    %p32 = por %p30, %p31
    %p33 = scmp.ne.s32.totalorder %s22, %s23
    %p34 = scmp.eq.s32.totalorder %s14, 0
    %p35 = por %p33, %p34
    %p36 = scmp.ne.s32.totalorder %s22, %s23
    %p37 = scmp.eq.s32.totalorder %s15, 1
    %p38 = por %p36, %p37
    %p40 = scmp.ne.s32.totalorder %s23, %s39
    %p41 = scmp.eq.s32.totalorder %s15, 0
    %p42 = por %p40, %p41
    %s44 = sadd.s32 %s43, 1
    %p47 = scmp.eq.s32.totalorder %s9, 1
    %p48 = scmp.ne.s32.totalorder %s43, %s45
    %p49 = scmp.eq.s32.totalorder %s9, 0
    %p50 = por %p48, %p49
    %p51 = scmp.ne.s32.totalorder %s43, %s45
    %p52 = scmp.eq.s32.totalorder %s14, 1
    %p53 = por %p51, %p52
    %p54 = scmp.ne.s32.totalorder %s45, %s46
    %p55 = scmp.eq.s32.totalorder %s14, 0
    %p56 = por %p54, %p55
    %p57 = scmp.ne.s32.totalorder %s45, %s46
    %p58 = scmp.eq.s32.totalorder %s15, 1
    %p59 = por %p57, %p58
    %p61 = scmp.ne.s32.totalorder %s46, %s60
    %p62 = scmp.eq.s32.totalorder %s15, 0
    %p63 = por %p61, %p62
    %s65 = sadd.s32 %s64, 1
    %p68 = scmp.eq.s32.totalorder %s9, 1
    %p69 = scmp.ne.s32.totalorder %s64, %s66
    %p70 = scmp.eq.s32.totalorder %s9, 0
    %p71 = por %p69, %p70
    %p72 = scmp.ne.s32.totalorder %s64, %s66
    %p73 = scmp.eq.s32.totalorder %s14, 1
    %p74 = por %p72, %p73
    %p75 = scmp.ne.s32.totalorder %s66, %s67
    %p76 = scmp.eq.s32.totalorder %s14, 0
    %p77 = por %p75, %p76
    %p78 = scmp.ne.s32.totalorder %s66, %s67
    %p79 = scmp.eq.s32.totalorder %s15, 1
    %p80 = por %p78, %p79
    %p82 = scmp.ne.s32.totalorder %s67, %s81
    %p83 = scmp.eq.s32.totalorder %s15, 0
    %p84 = por %p82, %p83
    %s85 = ssub.s32 %s9, %s16
    %p86 = scmp.eq.s32.totalorder %s85, 0
    %s88 = sadd.s32 %s87, 1
    %s89 = scalar_select %p86, %s87, %s88
    %p92 = pneg %p86
    %p93 = scmp.eq.s32.totalorder %s9, 1
    %p94 = por %p92, %p93
    %p95 = scmp.ne.s32.totalorder %s87, %s90
    %p96 = scmp.eq.s32.totalorder %s9, 0
    %p97 = por %p95, %p96
    %p98 = scmp.ne.s32.totalorder %s87, %s90
    %p99 = scmp.eq.s32.totalorder %s14, 1
    %p100 = por %p98, %p99
    %p101 = scmp.ne.s32.totalorder %s90, %s91
    %p102 = scmp.eq.s32.totalorder %s14, 0
    %p103 = por %p101, %p102
    %p104 = scmp.ne.s32.totalorder %s90, %s91
    %p105 = scmp.eq.s32.totalorder %s15, 1
    %p106 = por %p104, %p105
    %p108 = scmp.ne.s32.totalorder %s91, %s107
    %p109 = scmp.eq.s32.totalorder %s15, 0
    %p110 = por %p108, %p109
    %p111 = scmp.le.s32.totalorder 1, %s9
    %p112 = scmp.lt.s32.totalorder %s9, 3
    %p113 = pnand %p111, %p112
    %p114 = pneg %p113
    // Predicated region
    $region9: #{tpu_custom_call.1} parent=5 // pred_check
      _
    $region10: #{tpu_custom_call.1} parent=5 // pred_check_branch
      %116 = sbr.rel (%p113) target = $region12
    $region11: #{tpu_custom_call.1} parent=5 // pred_region
      %s117 = ssub.s32 %s9, 1
      // Predicated region
      $region13: #{tpu_custom_call.1} parent=11 // pred_check
        %p118 = pneg %p56
      $region14: #{tpu_custom_call.1} parent=11 // pred_check_branch
        %120 = sbr.rel (%p118) target = $region16
      $region15: #{tpu_custom_call.1} parent=11 // pred_region
        _
      $region16: #{tpu_custom_call.1} parent=11 // pred_fallthru
        _
      // Predicated region
      $region17: #{tpu_custom_call.1} parent=11 // pred_check
        %p121 = pneg %p77
      $region18: #{tpu_custom_call.1} parent=11 // pred_check_branch
        %123 = sbr.rel (%p121) target = $region20
      $region19: #{tpu_custom_call.1} parent=11 // pred_region
        _
      $region20: #{tpu_custom_call.1} parent=11 // pred_fallthru
        _
    $region12: #{tpu_custom_call.1} parent=5 // pred_fallthru
      _
    %p124 = scmp.lt.s32.totalorder %s9, 2
    // Predicated region
    $region21: #{tpu_custom_call.1} parent=5 // pred_check
      %p125 = pneg %p124
    $region22: #{tpu_custom_call.1} parent=5 // pred_check_branch
      %127 = sbr.rel (%p125) target = $region24
    $region23: #{tpu_custom_call.1} parent=5 // pred_region
      // Predicated region
      $region25: #{tpu_custom_call.1} parent=23 // pred_check
        %p128 = pneg %p29
      $region26: #{tpu_custom_call.1} parent=23 // pred_check_branch
        %130 = sbr.rel (%p128) target = $region28
      $region27: #{tpu_custom_call.1} parent=23 // pred_region
        %s131 = smul.u32 32, %s9
        %p132 = scmp.lt.s32.totalorder %s131, 63
        %s133 = scalar_select %p132, %s131, 63
        %s134 = smul.addr %s133, 8
        %s135 = scalar_lea.vmem %s0, %s134
        %s136 = smul.u32 32, %s9
      $region28: #{tpu_custom_call.1} parent=23 // pred_fallthru
        _
    $region24: #{tpu_custom_call.1} parent=5 // pred_fallthru
      _
    %p137 = scmp.le.s32.totalorder 1, %s9
    %p138 = scmp.lt.s32.totalorder %s9, 3
    %p139 = pnand %p137, %p138
    %p140 = pneg %p139
    // Predicated region
    $region29: #{tpu_custom_call.1} parent=5 // pred_check
      _
    $region30: #{tpu_custom_call.1} parent=5 // pred_check_branch
      %142 = sbr.rel (%p139) target = $region32
    $region31: #{tpu_custom_call.1} parent=5 // pred_region
      %s143 = ssub.s32 %s9, 1
      %s144 = smul.u32 32, %s14
      %p145 = scmp.lt.s32.totalorder %s144, 63
      %s146 = scalar_select %p145, %s144, 63
      %s147 = smul.addr %s146, 8
      %s148 = scalar_lea.vmem %s0, %s147
      %p149 = pneg %p35
      %p150 = pneg %p32
      %p151 = pneg %p56
      %p152 = pneg %p53
      %p153 = pneg %p77
      %p154 = pneg %p74
      %p155 = pneg %p103
      %p156 = pneg %p100
      %s157 = smul.u32 32, %s14
      %p158 = scmp.lt.s32.totalorder %s157, 63
      %s159 = scalar_select %p158, %s157, 63
      %s160 = smul.addr %s159, 8
      %s161 = scalar_lea.vmem %s3, %s160
      %s162 = smul.u32 32, %s14
      %p163 = scmp.lt.s32.totalorder %s162, 63
      %s164 = scalar_select %p163, %s162, 63
      %s165 = smul.addr %s164, 8
      %s166 = scalar_lea.vmem %s0, %s165
      %s167 = smul.u32 32, %s14
      %s168 = smul.u32 32, %s14
      %p169 = scmp.lt.s32.totalorder %s168, 63
      %s170 = scalar_select %p169, %s168, 63
      %s171 = smul.addr %s170, 8
      %s172 = scalar_lea.vmem %s3, %s171
      %s173 = smul.u32 32, %s14
      %v174 = vld [vmem:[%s166] sm:$0xff]
      %v175 = vld [vmem:[%s166 + $0x8] sm:$0xff]
      %v176 = vld [vmem:[%s166 + $0x10] sm:$0xff]
      %v177 = vld [vmem:[%s166 + $0x18] sm:$0xff]
      %v178 = vld [vmem:[%s166 + $0x20] sm:$0xff]
      %v179 = vld [vmem:[%s166 + $0x28] sm:$0xff]
      %v180 = vld [vmem:[%s166 + $0x30] sm:$0xff]
      %v181 = vld [vmem:[%s166 + $0x38] sm:$0xff]
      %v182 = vld [vmem:[%s166 + $0x40] sm:$0xff]
      %v183 = vld [vmem:[%s166 + $0x48] sm:$0xff]
      %v184 = vld [vmem:[%s166 + $0x50] sm:$0xff]
      %v185 = vld [vmem:[%s166 + $0x58] sm:$0xff]
      %v186 = vld [vmem:[%s166 + $0x60] sm:$0xff]
      %v187 = vld [vmem:[%s166 + $0x68] sm:$0xff]
      %v188 = vld [vmem:[%s166 + $0x70] sm:$0xff]
      %v189 = vld [vmem:[%s166 + $0x78] sm:$0xff]
      %v190 = vld [vmem:[%s166 + $0x80] sm:$0xff]
      %v191 = vld [vmem:[%s166 + $0x88] sm:$0xff]
      %v192 = vld [vmem:[%s166 + $0x90] sm:$0xff]
      %v193 = vld [vmem:[%s166 + $0x98] sm:$0xff]
      %v194 = vld [vmem:[%s166 + $0xa0] sm:$0xff]
      %v195 = vld [vmem:[%s166 + $0xa8] sm:$0xff]
      %v196 = vld [vmem:[%s166 + $0xb0] sm:$0xff]
      %v197 = vld [vmem:[%s166 + $0xb8] sm:$0xff]
      %v198 = vld [vmem:[%s166 + $0xc0] sm:$0xff]
      %v199 = vld [vmem:[%s166 + $0xc8] sm:$0xff]
      %v200 = vld [vmem:[%s166 + $0xd0] sm:$0xff]
      %v201 = vld [vmem:[%s166 + $0xd8] sm:$0xff]
      %v202 = vld [vmem:[%s166 + $0xe0] sm:$0xff]
      %v203 = vld [vmem:[%s166 + $0xe8] sm:$0xff]
      %v204 = vld [vmem:[%s166 + $0xf0] sm:$0xff]
      %v205 = vld [vmem:[%s166 + $0xf8] sm:$0xff]
      %v206 = vld [vmem:[%s1] sm:$0xf]
      %v207 = vld [vmem:[%s2] sm:$0x1]
      %v209 = vlaneseq
      %v210 = vshrl.u32 %v209, 7
      %v211 = vsub.s32 0, %v210
      %v212 = vrot.slane %v207, %v211
      %vm214 = vcmask 31744
      %v216 = vsel %vm214, %v174, 0
      %v219 = vsel %vm214, %v175, 0
      %v222 = vsel %vm214, %v176, 0
      %v225 = vsel %vm214, %v177, 0
      %v228 = vsel %vm214, %v178, 0
      %v231 = vsel %vm214, %v179, 0
      %v234 = vsel %vm214, %v180, 0
      %v237 = vsel %vm214, %v181, 0
      %v240 = vsel %vm214, %v182, 0
      %v243 = vsel %vm214, %v183, 0
      %v246 = vsel %vm214, %v184, 0
      %v249 = vsel %vm214, %v185, 0
      %v252 = vsel %vm214, %v186, 0
      %v255 = vsel %vm214, %v187, 0
      %v258 = vsel %vm214, %v188, 0
      %v261 = vsel %vm214, %v189, 0
      %v264 = vsel %vm214, %v190, 0
      %v267 = vsel %vm214, %v191, 0
      %v270 = vsel %vm214, %v192, 0
      %v273 = vsel %vm214, %v193, 0
      %v276 = vsel %vm214, %v194, 0
      %v279 = vsel %vm214, %v195, 0
      %v282 = vsel %vm214, %v196, 0
      %v285 = vsel %vm214, %v197, 0
      %v288 = vsel %vm214, %v198, 0
      %v291 = vsel %vm214, %v199, 0
      %v294 = vsel %vm214, %v200, 0
      %v297 = vsel %vm214, %v201, 0
      %v300 = vsel %vm214, %v202, 0
      %v303 = vsel %vm214, %v203, 0
      %v306 = vsel %vm214, %v204, 0
      %v309 = vsel %vm214, %v205, 0
      %vm311 = vcmask 1043456
      %v313 = vsel %vm311, %v206, 0
      %315 = vmatprep.subr.mxu0 0.0
      %v316 = vand.u32 %v313, 4294901760
      %317 = vmatpush1.msra.mxu0 %v316
      %318 = vmatprep.subr.mxu0 0.0
      %319 = vmatpush1.msra.mxu0 0.0
      %320 = vmatprep.subr.mxu0 0.0
      %321 = vmatpush1.msra.mxu0 0.0
      %322 = vmatprep.subr.mxu0 0.0
      %323 = vmatpush1.msra.mxu0 0.0
      %324 = vmatprep.subr.mxu0 0.0
      %325 = vmatpush1.msra.mxu0 0.0
      %326 = vmatprep.subr.mxu0 0.0
      %327 = vmatpush1.msra.mxu0 0.0
      %328 = vmatprep.subr.mxu0 0.0
      %329 = vmatpush1.msra.mxu0 0.0
      %330 = vmatprep.subr.mxu0 0.0
      %331 = vmatpush1.msra.mxu0 0.0
      %332 = vmatprep.subr.mxu0 0.0
      %333 = vmatpush1.msra.mxu0 0.0
      %334 = vmatprep.subr.mxu0 0.0
      %335 = vmatpush1.msra.mxu0 0.0
      %336 = vmatprep.subr.mxu0 0.0
      %337 = vmatpush1.msra.mxu0 0.0
      %338 = vmatprep.subr.mxu0 0.0
      %339 = vmatpush1.msra.mxu0 0.0
      %340 = vmatprep.subr.mxu0 0.0
      %341 = vmatpush1.msra.mxu0 0.0
      %342 = vmatprep.subr.mxu0 0.0
      %343 = vmatpush1.msra.mxu0 0.0
      %344 = vmatprep.subr.mxu0 0.0
      %345 = vmatpush1.msra.mxu0 0.0
      %346 = vmatprep.subr.mxu0 0.0
      %347 = vmatpush1.msra.mxu0 0.0
      %348 = vmatprep.subr.mxu0 0.0
      %349 = vmatpush1.msra.mxu0 0.0
      %350 = vmatprep.subr.mxu0 0.0
      %351 = vmatpush1.msra.mxu0 0.0
      %352 = vmatprep.subr.mxu0 0.0
      %353 = vmatpush1.msra.mxu0 0.0
      %354 = vmatprep.subr.mxu0 0.0
      %355 = vmatpush1.msra.mxu0 0.0
      %356 = vmatprep.subr.mxu0 0.0
      %357 = vmatpush1.msra.mxu0 0.0
      %358 = vmatprep.subr.mxu0 0.0
      %359 = vmatpush1.msra.mxu0 0.0
      %360 = vmatprep.subr.mxu0 0.0
      %361 = vmatpush1.msra.mxu0 0.0
      %362 = vmatprep.subr.mxu0 0.0
      %363 = vmatpush1.msra.mxu0 0.0
      %364 = vmatprep.subr.mxu0 0.0
      %365 = vmatpush1.msra.mxu0 0.0
      %366 = vmatprep.subr.mxu0 0.0
      %367 = vmatpush1.msra.mxu0 0.0
      %368 = vmatprep.subr.mxu0 0.0
      %369 = vmatpush1.msra.mxu0 0.0
      %370 = vmatprep.subr.mxu0 0.0
      %371 = vmatpush1.msra.mxu0 0.0
      %372 = vmatprep.subr.mxu0 0.0
      %373 = vmatpush1.msra.mxu0 0.0
      %374 = vmatprep.subr.mxu0 0.0
      %375 = vmatpush1.msra.mxu0 0.0
      %376 = vmatprep.subr.mxu0 0.0
      %377 = vmatpush1.msra.mxu0 0.0
      %378 = vmatprep.subr.mxu0 0.0
      %379 = vmatpush1.msra.mxu0 0.0
      %380 = vmatprep.mubr.f32.mxu0 0.0
      %v381 = vand.u32 %v216, 4294901760
      %v382 = vsub.f32 %v216, %v381
      %v383 = vand.u32 %v382, 4294901760
      %v384 = vsub.f32 %v382, %v383
      %v385 = vand.u32 %v384, 4294901760
      %386 = vmatmul.mubr.f32.gmra.mrb[0].mxu0 %v385
      %v387 = vpop.f32.mrb[0].mxu0
      %v388 = vadd.f32 %v212, %v387
      %v389 = vpop.f32.mrb[0].mxu0
      %390 = vmatprep.mubr.f32.mxu0 0.0
      %v391 = vand.u32 %v219, 4294901760
      %v392 = vsub.f32 %v219, %v391
      %v393 = vand.u32 %v392, 4294901760
      %v394 = vsub.f32 %v392, %v393
      %v395 = vand.u32 %v394, 4294901760
      %396 = vmatmul.mubr.f32.gmra.mrb[0].mxu0 %v395
      %v397 = vpop.f32.mrb[0].mxu0
      %v398 = vadd.f32 %v212, %v397
      %v399 = vpop.f32.mrb[0].mxu0
      %400 = vmatprep.mubr.f32.mxu0 0.0
      %v401 = vand.u32 %v222, 4294901760
      %v402 = vsub.f32 %v222, %v401
      %v403 = vand.u32 %v402, 4294901760
      %v404 = vsub.f32 %v402, %v403
      %v405 = vand.u32 %v404, 4294901760
      %406 = vmatmul.mubr.f32.gmra.mrb[0].mxu0 %v405
      %v407 = vpop.f32.mrb[0].mxu0
      %v408 = vadd.f32 %v212, %v407
      %v409 = vpop.f32.mrb[0].mxu0
      %410 = vmatprep.mubr.f32.mxu0 0.0
      %v411 = vand.u32 %v225, 4294901760
      %v412 = vsub.f32 %v225, %v411
      %v413 = vand.u32 %v412, 4294901760
      %v414 = vsub.f32 %v412, %v413
      %v415 = vand.u32 %v414, 4294901760
      %416 = vmatmul.mubr.f32.gmra.mrb[0].mxu0 %v415
      %v417 = vpop.f32.mrb[0].mxu0
      %v418 = vadd.f32 %v212, %v417
      %v419 = vpop.f32.mrb[0].mxu0
      %420 = vmatprep.mubr.f32.mxu0 0.0
      %v421 = vand.u32 %v228, 4294901760
      %v422 = vsub.f32 %v228, %v421
      %v423 = vand.u32 %v422, 4294901760
      %v424 = vsub.f32 %v422, %v423
      %v425 = vand.u32 %v424, 4294901760
      %426 = vmatmul.mubr.f32.gmra.mrb[0].mxu0 %v425
      %v427 = vpop.f32.mrb[0].mxu0
      %v428 = vadd.f32 %v212, %v427
      %v429 = vpop.f32.mrb[0].mxu0
      %430 = vmatprep.mubr.f32.mxu0 0.0
      %v431 = vand.u32 %v231, 4294901760
      %v432 = vsub.f32 %v231, %v431
      %v433 = vand.u32 %v432, 4294901760
      %v434 = vsub.f32 %v432, %v433
      %v435 = vand.u32 %v434, 4294901760
      %436 = vmatmul.mubr.f32.gmra.mrb[0].mxu0 %v435
      %v437 = vpop.f32.mrb[0].mxu0
      %v438 = vadd.f32 %v212, %v437
      %v439 = vpop.f32.mrb[0].mxu0
      %440 = vmatprep.mubr.f32.mxu0 0.0
      %v441 = vand.u32 %v234, 4294901760
      %v442 = vsub.f32 %v234, %v441
      %v443 = vand.u32 %v442, 4294901760
      %v444 = vsub.f32 %v442, %v443
      %v445 = vand.u32 %v444, 4294901760
      %446 = vmatmul.mubr.f32.gmra.mrb[0].mxu0 %v445
      %v447 = vpop.f32.mrb[0].mxu0
      %v448 = vadd.f32 %v212, %v447
      %v449 = vpop.f32.mrb[0].mxu0
      %450 = vmatprep.mubr.f32.mxu0 0.0
      %v451 = vand.u32 %v237, 4294901760
      %v452 = vsub.f32 %v237, %v451
      %v453 = vand.u32 %v452, 4294901760
      %v454 = vsub.f32 %v452, %v453
      %v455 = vand.u32 %v454, 4294901760
      %456 = vmatmul.mubr.f32.gmra.mrb[0].mxu0 %v455
      %v457 = vpop.f32.mrb[0].mxu0
      %v458 = vadd.f32 %v212, %v457
      %v459 = vpop.f32.mrb[0].mxu0
      %460 = vmatprep.mubr.f32.mxu0 0.0
      %v461 = vand.u32 %v240, 4294901760
      %v462 = vsub.f32 %v240, %v461
      %v463 = vand.u32 %v462, 4294901760
      %v464 = vsub.f32 %v462, %v463
      %v465 = vand.u32 %v464, 4294901760
      %466 = vmatmul.mubr.f32.gmra.mrb[0].mxu0 %v465
      %v467 = vpop.f32.mrb[0].mxu0
      %v468 = vadd.f32 %v212, %v467
      %v469 = vpop.f32.mrb[0].mxu0
      %470 = vmatprep.mubr.f32.mxu0 0.0
      %v471 = vand.u32 %v243, 4294901760
      %v472 = vsub.f32 %v243, %v471
      %v473 = vand.u32 %v472, 4294901760
      %v474 = vsub.f32 %v472, %v473
      %v475 = vand.u32 %v474, 4294901760
      %476 = vmatmul.mubr.f32.gmra.mrb[0].mxu0 %v475
      %v477 = vpop.f32.mrb[0].mxu0
      %v478 = vadd.f32 %v212, %v477
      %v479 = vpop.f32.mrb[0].mxu0
      %480 = vmatprep.mubr.f32.mxu0 0.0
      %v481 = vand.u32 %v246, 4294901760
      %v482 = vsub.f32 %v246, %v481
      %v483 = vand.u32 %v482, 4294901760
      %v484 = vsub.f32 %v482, %v483
      %v485 = vand.u32 %v484, 4294901760
      %486 = vmatmul.mubr.f32.gmra.mrb[0].mxu0 %v485
      %v487 = vpop.f32.mrb[0].mxu0
      %v488 = vadd.f32 %v212, %v487
      %v489 = vpop.f32.mrb[0].mxu0
      %490 = vmatprep.mubr.f32.mxu0 0.0
      %v491 = vand.u32 %v249, 4294901760
      %v492 = vsub.f32 %v249, %v491
      %v493 = vand.u32 %v492, 4294901760
      %v494 = vsub.f32 %v492, %v493
      %v495 = vand.u32 %v494, 4294901760
      %496 = vmatmul.mubr.f32.gmra.mrb[0].mxu0 %v495
      %v497 = vpop.f32.mrb[0].mxu0
      %v498 = vadd.f32 %v212, %v497
      %v499 = vpop.f32.mrb[0].mxu0
      %500 = vmatprep.mubr.f32.mxu0 0.0
      %v501 = vand.u32 %v252, 4294901760
      %v502 = vsub.f32 %v252, %v501
      %v503 = vand.u32 %v502, 4294901760
      %v504 = vsub.f32 %v502, %v503
      %v505 = vand.u32 %v504, 4294901760
      %506 = vmatmul.mubr.f32.gmra.mrb[0].mxu0 %v505
      %v507 = vpop.f32.mrb[0].mxu0
      %v508 = vadd.f32 %v212, %v507
      %v509 = vpop.f32.mrb[0].mxu0
      %510 = vmatprep.mubr.f32.mxu0 0.0
      %v511 = vand.u32 %v255, 4294901760
      %v512 = vsub.f32 %v255, %v511
      %v513 = vand.u32 %v512, 4294901760
      %v514 = vsub.f32 %v512, %v513
      %v515 = vand.u32 %v514, 4294901760
      %516 = vmatmul.mubr.f32.gmra.mrb[0].mxu0 %v515
      %v517 = vpop.f32.mrb[0].mxu0
      %v518 = vadd.f32 %v212, %v517
      %v519 = vpop.f32.mrb[0].mxu0
      %520 = vmatprep.mubr.f32.mxu0 0.0
      %v521 = vand.u32 %v258, 4294901760
      %v522 = vsub.f32 %v258, %v521
      %v523 = vand.u32 %v522, 4294901760
      %v524 = vsub.f32 %v522, %v523
      %v525 = vand.u32 %v524, 4294901760
      %526 = vmatmul.mubr.f32.gmra.mrb[0].mxu0 %v525
      %v527 = vpop.f32.mrb[0].mxu0
      %v528 = vadd.f32 %v212, %v527
      %v529 = vpop.f32.mrb[0].mxu0
      %530 = vmatprep.mubr.f32.mxu0 0.0
      %v531 = vand.u32 %v261, 4294901760
      %v532 = vsub.f32 %v261, %v531
      %v533 = vand.u32 %v532, 4294901760
      %v534 = vsub.f32 %v532, %v533
      %v535 = vand.u32 %v534, 4294901760
      %536 = vmatmul.mubr.f32.gmra.mrb[0].mxu0 %v535
      %v537 = vpop.f32.mrb[0].mxu0
      %v538 = vadd.f32 %v212, %v537
      %v539 = vpop.f32.mrb[0].mxu0
      %540 = vmatprep.mubr.f32.mxu0 0.0
      %v541 = vand.u32 %v264, 4294901760
      %v542 = vsub.f32 %v264, %v541
      %v543 = vand.u32 %v542, 4294901760
      %v544 = vsub.f32 %v542, %v543
      %v545 = vand.u32 %v544, 4294901760
      %546 = vmatmul.mubr.f32.gmra.mrb[0].mxu0 %v545
      %v547 = vpop.f32.mrb[0].mxu0
      %v548 = vadd.f32 %v212, %v547
      %v549 = vpop.f32.mrb[0].mxu0
      %550 = vmatprep.mubr.f32.mxu0 0.0
      %v551 = vand.u32 %v267, 4294901760
      %v552 = vsub.f32 %v267, %v551
      %v553 = vand.u32 %v552, 4294901760
      %v554 = vsub.f32 %v552, %v553
      %v555 = vand.u32 %v554, 4294901760
      %556 = vmatmul.mubr.f32.gmra.mrb[0].mxu0 %v555
      %v557 = vpop.f32.mrb[0].mxu0
      %v558 = vadd.f32 %v212, %v557
      %v559 = vpop.f32.mrb[0].mxu0
      %560 = vmatprep.mubr.f32.mxu0 0.0
      %v561 = vand.u32 %v270, 4294901760
      %v562 = vsub.f32 %v270, %v561
      %v563 = vand.u32 %v562, 4294901760
      %v564 = vsub.f32 %v562, %v563
      %v565 = vand.u32 %v564, 4294901760
      %566 = vmatmul.mubr.f32.gmra.mrb[0].mxu0 %v565
      %v567 = vpop.f32.mrb[0].mxu0
      %v568 = vadd.f32 %v212, %v567
      %v569 = vpop.f32.mrb[0].mxu0
      %570 = vmatprep.mubr.f32.mxu0 0.0
      %v571 = vand.u32 %v273, 4294901760
      %v572 = vsub.f32 %v273, %v571
      %v573 = vand.u32 %v572, 4294901760
      %v574 = vsub.f32 %v572, %v573
      %v575 = vand.u32 %v574, 4294901760
      %576 = vmatmul.mubr.f32.gmra.mrb[0].mxu0 %v575
      %v577 = vpop.f32.mrb[0].mxu0
      %v578 = vadd.f32 %v212, %v577
      %v579 = vpop.f32.mrb[0].mxu0
      %580 = vmatprep.mubr.f32.mxu0 0.0
      %v581 = vand.u32 %v276, 4294901760
      %v582 = vsub.f32 %v276, %v581
      %v583 = vand.u32 %v582, 4294901760
      %v584 = vsub.f32 %v582, %v583
      %v585 = vand.u32 %v584, 4294901760
      %586 = vmatmul.mubr.f32.gmra.mrb[0].mxu0 %v585
      %v587 = vpop.f32.mrb[0].mxu0
      %v588 = vadd.f32 %v212, %v587
      %v589 = vpop.f32.mrb[0].mxu0
      %590 = vmatprep.mubr.f32.mxu0 0.0
      %v591 = vand.u32 %v279, 4294901760
      %v592 = vsub.f32 %v279, %v591
      %v593 = vand.u32 %v592, 4294901760
      %v594 = vsub.f32 %v592, %v593
      %v595 = vand.u32 %v594, 4294901760
      %596 = vmatmul.mubr.f32.gmra.mrb[0].mxu0 %v595
      %v597 = vpop.f32.mrb[0].mxu0
      %v598 = vadd.f32 %v212, %v597
      %v599 = vpop.f32.mrb[0].mxu0
      %600 = vmatprep.mubr.f32.mxu0 0.0
      %v601 = vand.u32 %v282, 4294901760
      %v602 = vsub.f32 %v282, %v601
      %v603 = vand.u32 %v602, 4294901760
      %v604 = vsub.f32 %v602, %v603
      %v605 = vand.u32 %v604, 4294901760
      %606 = vmatmul.mubr.f32.gmra.mrb[0].mxu0 %v605
      %v607 = vpop.f32.mrb[0].mxu0
      %v608 = vadd.f32 %v212, %v607
      %v609 = vpop.f32.mrb[0].mxu0
      %610 = vmatprep.mubr.f32.mxu0 0.0
      %v611 = vand.u32 %v285, 4294901760
      %v612 = vsub.f32 %v285, %v611
      %v613 = vand.u32 %v612, 4294901760
      %v614 = vsub.f32 %v612, %v613
      %v615 = vand.u32 %v614, 4294901760
      %616 = vmatmul.mubr.f32.gmra.mrb[0].mxu0 %v615
      %v617 = vpop.f32.mrb[0].mxu0
      %v618 = vadd.f32 %v212, %v617
      %v619 = vpop.f32.mrb[0].mxu0
      %620 = vmatprep.mubr.f32.mxu0 0.0
      %v621 = vand.u32 %v288, 4294901760
      %v622 = vsub.f32 %v288, %v621
      %v623 = vand.u32 %v622, 4294901760
      %v624 = vsub.f32 %v622, %v623
      %v625 = vand.u32 %v624, 4294901760
      %626 = vmatmul.mubr.f32.gmra.mrb[0].mxu0 %v625
      %v627 = vpop.f32.mrb[0].mxu0
      %v628 = vadd.f32 %v212, %v627
      %v629 = vpop.f32.mrb[0].mxu0
      %630 = vmatprep.mubr.f32.mxu0 0.0
      %v631 = vand.u32 %v291, 4294901760
      %v632 = vsub.f32 %v291, %v631
      %v633 = vand.u32 %v632, 4294901760
      %v634 = vsub.f32 %v632, %v633
      %v635 = vand.u32 %v634, 4294901760
      %636 = vmatmul.mubr.f32.gmra.mrb[0].mxu0 %v635
      %v637 = vpop.f32.mrb[0].mxu0
      %v638 = vadd.f32 %v212, %v637
      %v639 = vpop.f32.mrb[0].mxu0
      %640 = vmatprep.mubr.f32.mxu0 0.0
      %v641 = vand.u32 %v294, 4294901760
      %v642 = vsub.f32 %v294, %v641
      %v643 = vand.u32 %v642, 4294901760
      %v644 = vsub.f32 %v642, %v643
      %v645 = vand.u32 %v644, 4294901760
      %646 = vmatmul.mubr.f32.gmra.mrb[0].mxu0 %v645
      %v647 = vpop.f32.mrb[0].mxu0
      %v648 = vadd.f32 %v212, %v647
      %v649 = vpop.f32.mrb[0].mxu0
      %650 = vmatprep.mubr.f32.mxu0 0.0
      %v651 = vand.u32 %v297, 4294901760
      %v652 = vsub.f32 %v297, %v651
      %v653 = vand.u32 %v652, 4294901760
      %v654 = vsub.f32 %v652, %v653
      %v655 = vand.u32 %v654, 4294901760
      %656 = vmatmul.mubr.f32.gmra.mrb[0].mxu0 %v655
      %v657 = vpop.f32.mrb[0].mxu0
      %v658 = vadd.f32 %v212, %v657
      %v659 = vpop.f32.mrb[0].mxu0
      %660 = vmatprep.mubr.f32.mxu0 0.0
      %v661 = vand.u32 %v300, 4294901760
      %v662 = vsub.f32 %v300, %v661
      %v663 = vand.u32 %v662, 4294901760
      %v664 = vsub.f32 %v662, %v663
      %v665 = vand.u32 %v664, 4294901760
      %666 = vmatmul.mubr.f32.gmra.mrb[0].mxu0 %v665
      %v667 = vpop.f32.mrb[0].mxu0
      %v668 = vadd.f32 %v212, %v667
      %v669 = vpop.f32.mrb[0].mxu0
      %670 = vmatprep.mubr.f32.mxu0 0.0
      %v671 = vand.u32 %v303, 4294901760
      %v672 = vsub.f32 %v303, %v671
      %v673 = vand.u32 %v672, 4294901760
      %v674 = vsub.f32 %v672, %v673
      %v675 = vand.u32 %v674, 4294901760
      %676 = vmatmul.mubr.f32.gmra.mrb[0].mxu0 %v675
      %v677 = vpop.f32.mrb[0].mxu0
      %v678 = vadd.f32 %v212, %v677
      %v679 = vpop.f32.mrb[0].mxu0
      %680 = vmatprep.mubr.f32.mxu0 0.0
      %v681 = vand.u32 %v306, 4294901760
      %v682 = vsub.f32 %v306, %v681
      %v683 = vand.u32 %v682, 4294901760
      %v684 = vsub.f32 %v682, %v683
      %v685 = vand.u32 %v684, 4294901760
      %686 = vmatmul.mubr.f32.gmra.mrb[0].mxu0 %v685
      %v687 = vpop.f32.mrb[0].mxu0
      %v688 = vadd.f32 %v212, %v687
      %v689 = vpop.f32.mrb[0].mxu0
      %690 = vmatprep.mubr.f32.mxu0 0.0
      %v691 = vand.u32 %v309, 4294901760
      %v692 = vsub.f32 %v309, %v691
      %v693 = vand.u32 %v692, 4294901760
      %v694 = vsub.f32 %v692, %v693
      %v695 = vand.u32 %v694, 4294901760
      %696 = vmatmul.mubr.f32.gmra.mrb[0].mxu0 %v695
      %v697 = vpop.f32.mrb[0].mxu0
      %v698 = vadd.f32 %v212, %v697
      %v699 = vpop.f32.mrb[0].mxu0
      %700 = vdwg.mxu0
      %701 = vmatprep.subr.mxu0 0.0
      %v702 = vand.u32 %v313, 4294901760
      %v703 = vsub.f32 %v313, %v702
      %v704 = vand.u32 %v703, 4294901760
      %v705 = vsub.f32 %v703, %v704
      %v706 = vand.u32 %v705, 4294901760
      %707 = vmatpush1.msra.mxu0 %v706
      %708 = vmatprep.subr.mxu0 0.0
      %709 = vmatpush1.msra.mxu0 0.0
      %710 = vmatprep.subr.mxu0 0.0
      %711 = vmatpush1.msra.mxu0 0.0
      %712 = vmatprep.subr.mxu0 0.0
      %713 = vmatpush1.msra.mxu0 0.0
      %714 = vmatprep.subr.mxu0 0.0
      %715 = vmatpush1.msra.mxu0 0.0
      %716 = vmatprep.subr.mxu0 0.0
      %717 = vmatpush1.msra.mxu0 0.0
      %718 = vmatprep.subr.mxu0 0.0
      %719 = vmatpush1.msra.mxu0 0.0
      %720 = vmatprep.subr.mxu0 0.0
      %721 = vmatpush1.msra.mxu0 0.0
      %722 = vmatprep.subr.mxu0 0.0
      %723 = vmatpush1.msra.mxu0 0.0
      %724 = vmatprep.subr.mxu0 0.0
      %725 = vmatpush1.msra.mxu0 0.0
      %726 = vmatprep.subr.mxu0 0.0
      %727 = vmatpush1.msra.mxu0 0.0
      %728 = vmatprep.subr.mxu0 0.0
      %729 = vmatpush1.msra.mxu0 0.0
      %730 = vmatprep.subr.mxu0 0.0
      %731 = vmatpush1.msra.mxu0 0.0
      %732 = vmatprep.subr.mxu0 0.0
      %733 = vmatpush1.msra.mxu0 0.0
      %734 = vmatprep.subr.mxu0 0.0
      %735 = vmatpush1.msra.mxu0 0.0
      %736 = vmatprep.subr.mxu0 0.0
      %737 = vmatpush1.msra.mxu0 0.0
      %738 = vmatprep.subr.mxu0 0.0
      %739 = vmatpush1.msra.mxu0 0.0
      %740 = vmatprep.subr.mxu0 0.0
      %741 = vmatpush1.msra.mxu0 0.0
      %742 = vmatprep.subr.mxu0 0.0
      %743 = vmatpush1.msra.mxu0 0.0
      %744 = vmatprep.subr.mxu0 0.0
      %745 = vmatpush1.msra.mxu0 0.0
      %746 = vmatprep.subr.mxu0 0.0
      %747 = vmatpush1.msra.mxu0 0.0
      %748 = vmatprep.subr.mxu0 0.0
      %749 = vmatpush1.msra.mxu0 0.0
      %750 = vmatprep.subr.mxu0 0.0
      %751 = vmatpush1.msra.mxu0 0.0
      %752 = vmatprep.subr.mxu0 0.0
      %753 = vmatpush1.msra.mxu0 0.0
      %754 = vmatprep.subr.mxu0 0.0
      %755 = vmatpush1.msra.mxu0 0.0
      %756 = vmatprep.subr.mxu0 0.0
      %757 = vmatpush1.msra.mxu0 0.0
      %758 = vmatprep.subr.mxu0 0.0
      %759 = vmatpush1.msra.mxu0 0.0
      %760 = vmatprep.subr.mxu0 0.0
      %761 = vmatpush1.msra.mxu0 0.0
      %762 = vmatprep.subr.mxu0 0.0
      %763 = vmatpush1.msra.mxu0 0.0
      %764 = vmatprep.subr.mxu0 0.0
      %765 = vmatpush1.msra.mxu0 0.0
      %766 = vmatprep.subr.mxu0 0.0
      %767 = vmatpush1.msra.mxu0 0.0
      %768 = vmatprep.subr.mxu0 0.0
      %769 = vmatpush1.msra.mxu0 0.0
      %770 = vmatprep.mubr.f32.mxu0 0.0
      %v771 = vand.u32 %v216, 4294901760
      %772 = vmatmul.mubr.f32.gmra.mrb[0].mxu0 %v771
      %v773 = vpop.f32.mrb[0].mxu0
      %v774 = vadd.f32 %v388, %v773
      %v775 = vpop.f32.mrb[0].mxu0
      %776 = vmatprep.mubr.f32.mxu0 0.0
      %v777 = vand.u32 %v219, 4294901760
      %778 = vmatmul.mubr.f32.gmra.mrb[0].mxu0 %v777
      %v779 = vpop.f32.mrb[0].mxu0
      %v780 = vadd.f32 %v398, %v779
      %v781 = vpop.f32.mrb[0].mxu0
      %782 = vmatprep.mubr.f32.mxu0 0.0
      %v783 = vand.u32 %v222, 4294901760
      %784 = vmatmul.mubr.f32.gmra.mrb[0].mxu0 %v783
      %v785 = vpop.f32.mrb[0].mxu0
      %v786 = vadd.f32 %v408, %v785
      %v787 = vpop.f32.mrb[0].mxu0
      %788 = vmatprep.mubr.f32.mxu0 0.0
      %v789 = vand.u32 %v225, 4294901760
      %790 = vmatmul.mubr.f32.gmra.mrb[0].mxu0 %v789
      %v791 = vpop.f32.mrb[0].mxu0
      %v792 = vadd.f32 %v418, %v791
      %v793 = vpop.f32.mrb[0].mxu0
      %794 = vmatprep.mubr.f32.mxu0 0.0
      %v795 = vand.u32 %v228, 4294901760
      %796 = vmatmul.mubr.f32.gmra.mrb[0].mxu0 %v795
      %v797 = vpop.f32.mrb[0].mxu0
      %v798 = vadd.f32 %v428, %v797
      %v799 = vpop.f32.mrb[0].mxu0
      %800 = vmatprep.mubr.f32.mxu0 0.0
      %v801 = vand.u32 %v231, 4294901760
      %802 = vmatmul.mubr.f32.gmra.mrb[0].mxu0 %v801
      %v803 = vpop.f32.mrb[0].mxu0
      %v804 = vadd.f32 %v438, %v803
      %v805 = vpop.f32.mrb[0].mxu0
      %806 = vmatprep.mubr.f32.mxu0 0.0
      %v807 = vand.u32 %v234, 4294901760
      %808 = vmatmul.mubr.f32.gmra.mrb[0].mxu0 %v807
      %v809 = vpop.f32.mrb[0].mxu0
      %v810 = vadd.f32 %v448, %v809
      %v811 = vpop.f32.mrb[0].mxu0
      %812 = vmatprep.mubr.f32.mxu0 0.0
      %v813 = vand.u32 %v237, 4294901760
      %814 = vmatmul.mubr.f32.gmra.mrb[0].mxu0 %v813
      %v815 = vpop.f32.mrb[0].mxu0
      %v816 = vadd.f32 %v458, %v815
      %v817 = vpop.f32.mrb[0].mxu0
      %818 = vmatprep.mubr.f32.mxu0 0.0
      %v819 = vand.u32 %v240, 4294901760
      %820 = vmatmul.mubr.f32.gmra.mrb[0].mxu0 %v819
      %v821 = vpop.f32.mrb[0].mxu0
      %v822 = vadd.f32 %v468, %v821
      %v823 = vpop.f32.mrb[0].mxu0
      %824 = vmatprep.mubr.f32.mxu0 0.0
      %v825 = vand.u32 %v243, 4294901760
      %826 = vmatmul.mubr.f32.gmra.mrb[0].mxu0 %v825
      %v827 = vpop.f32.mrb[0].mxu0
      %v828 = vadd.f32 %v478, %v827
      %v829 = vpop.f32.mrb[0].mxu0
      %830 = vmatprep.mubr.f32.mxu0 0.0
      %v831 = vand.u32 %v246, 4294901760
      %832 = vmatmul.mubr.f32.gmra.mrb[0].mxu0 %v831
      %v833 = vpop.f32.mrb[0].mxu0
      %v834 = vadd.f32 %v488, %v833
      %v835 = vpop.f32.mrb[0].mxu0
      %836 = vmatprep.mubr.f32.mxu0 0.0
      %v837 = vand.u32 %v249, 4294901760
      %838 = vmatmul.mubr.f32.gmra.mrb[0].mxu0 %v837
      %v839 = vpop.f32.mrb[0].mxu0
      %v840 = vadd.f32 %v498, %v839
      %v841 = vpop.f32.mrb[0].mxu0
      %842 = vmatprep.mubr.f32.mxu0 0.0
      %v843 = vand.u32 %v252, 4294901760
      %844 = vmatmul.mubr.f32.gmra.mrb[0].mxu0 %v843
      %v845 = vpop.f32.mrb[0].mxu0
      %v846 = vadd.f32 %v508, %v845
      %v847 = vpop.f32.mrb[0].mxu0
      %848 = vmatprep.mubr.f32.mxu0 0.0
      %v849 = vand.u32 %v255, 4294901760
      %850 = vmatmul.mubr.f32.gmra.mrb[0].mxu0 %v849
      %v851 = vpop.f32.mrb[0].mxu0
      %v852 = vadd.f32 %v518, %v851
      %v853 = vpop.f32.mrb[0].mxu0
      %854 = vmatprep.mubr.f32.mxu0 0.0
      %v855 = vand.u32 %v258, 4294901760
      %856 = vmatmul.mubr.f32.gmra.mrb[0].mxu0 %v855
      %v857 = vpop.f32.mrb[0].mxu0
      %v858 = vadd.f32 %v528, %v857
      %v859 = vpop.f32.mrb[0].mxu0
      %860 = vmatprep.mubr.f32.mxu0 0.0
      %v861 = vand.u32 %v261, 4294901760
      %862 = vmatmul.mubr.f32.gmra.mrb[0].mxu0 %v861
      %v863 = vpop.f32.mrb[0].mxu0
      %v864 = vadd.f32 %v538, %v863
      %v865 = vpop.f32.mrb[0].mxu0
      %866 = vmatprep.mubr.f32.mxu0 0.0
      %v867 = vand.u32 %v264, 4294901760
      %868 = vmatmul.mubr.f32.gmra.mrb[0].mxu0 %v867
      %v869 = vpop.f32.mrb[0].mxu0
      %v870 = vadd.f32 %v548, %v869
      %v871 = vpop.f32.mrb[0].mxu0
      %872 = vmatprep.mubr.f32.mxu0 0.0
      %v873 = vand.u32 %v267, 4294901760
      %874 = vmatmul.mubr.f32.gmra.mrb[0].mxu0 %v873
      %v875 = vpop.f32.mrb[0].mxu0
      %v876 = vadd.f32 %v558, %v875
      %v877 = vpop.f32.mrb[0].mxu0
      %878 = vmatprep.mubr.f32.mxu0 0.0
      %v879 = vand.u32 %v270, 4294901760
      %880 = vmatmul.mubr.f32.gmra.mrb[0].mxu0 %v879
      %v881 = vpop.f32.mrb[0].mxu0
      %v882 = vadd.f32 %v568, %v881
      %v883 = vpop.f32.mrb[0].mxu0
      %884 = vmatprep.mubr.f32.mxu0 0.0
      %v885 = vand.u32 %v273, 4294901760
      %886 = vmatmul.mubr.f32.gmra.mrb[0].mxu0 %v885
      %v887 = vpop.f32.mrb[0].mxu0
      %v888 = vadd.f32 %v578, %v887
      %v889 = vpop.f32.mrb[0].mxu0
      %890 = vmatprep.mubr.f32.mxu0 0.0
      %v891 = vand.u32 %v276, 4294901760
      %892 = vmatmul.mubr.f32.gmra.mrb[0].mxu0 %v891
      %v893 = vpop.f32.mrb[0].mxu0
      %v894 = vadd.f32 %v588, %v893
      %v895 = vpop.f32.mrb[0].mxu0
      %896 = vmatprep.mubr.f32.mxu0 0.0
      %v897 = vand.u32 %v279, 4294901760
      %898 = vmatmul.mubr.f32.gmra.mrb[0].mxu0 %v897
      %v899 = vpop.f32.mrb[0].mxu0
      %v900 = vadd.f32 %v598, %v899
      %v901 = vpop.f32.mrb[0].mxu0
      %902 = vmatprep.mubr.f32.mxu0 0.0
      %v903 = vand.u32 %v282, 4294901760
      %904 = vmatmul.mubr.f32.gmra.mrb[0].mxu0 %v903
      %v905 = vpop.f32.mrb[0].mxu0
      %v906 = vadd.f32 %v608, %v905
      %v907 = vpop.f32.mrb[0].mxu0
      %908 = vmatprep.mubr.f32.mxu0 0.0
      %v909 = vand.u32 %v285, 4294901760
      %910 = vmatmul.mubr.f32.gmra.mrb[0].mxu0 %v909
      %v911 = vpop.f32.mrb[0].mxu0
      %v912 = vadd.f32 %v618, %v911
      %v913 = vpop.f32.mrb[0].mxu0
      %914 = vmatprep.mubr.f32.mxu0 0.0
      %v915 = vand.u32 %v288, 4294901760
      %916 = vmatmul.mubr.f32.gmra.mrb[0].mxu0 %v915
      %v917 = vpop.f32.mrb[0].mxu0
      %v918 = vadd.f32 %v628, %v917
      %v919 = vpop.f32.mrb[0].mxu0
      %920 = vmatprep.mubr.f32.mxu0 0.0
      %v921 = vand.u32 %v291, 4294901760
      %922 = vmatmul.mubr.f32.gmra.mrb[0].mxu0 %v921
      %v923 = vpop.f32.mrb[0].mxu0
      %v924 = vadd.f32 %v638, %v923
      %v925 = vpop.f32.mrb[0].mxu0
      %926 = vmatprep.mubr.f32.mxu0 0.0
      %v927 = vand.u32 %v294, 4294901760
      %928 = vmatmul.mubr.f32.gmra.mrb[0].mxu0 %v927
      %v929 = vpop.f32.mrb[0].mxu0
      %v930 = vadd.f32 %v648, %v929
      %v931 = vpop.f32.mrb[0].mxu0
      %932 = vmatprep.mubr.f32.mxu0 0.0
      %v933 = vand.u32 %v297, 4294901760
      %934 = vmatmul.mubr.f32.gmra.mrb[0].mxu0 %v933
      %v935 = vpop.f32.mrb[0].mxu0
      %v936 = vadd.f32 %v658, %v935
      %v937 = vpop.f32.mrb[0].mxu0
      %938 = vmatprep.mubr.f32.mxu0 0.0
      %v939 = vand.u32 %v300, 4294901760
      %940 = vmatmul.mubr.f32.gmra.mrb[0].mxu0 %v939
      %v941 = vpop.f32.mrb[0].mxu0
      %v942 = vadd.f32 %v668, %v941
      %v943 = vpop.f32.mrb[0].mxu0
      %944 = vmatprep.mubr.f32.mxu0 0.0
      %v945 = vand.u32 %v303, 4294901760
      %946 = vmatmul.mubr.f32.gmra.mrb[0].mxu0 %v945
      %v947 = vpop.f32.mrb[0].mxu0
      %v948 = vadd.f32 %v678, %v947
      %v949 = vpop.f32.mrb[0].mxu0
      %950 = vmatprep.mubr.f32.mxu0 0.0
      %v951 = vand.u32 %v306, 4294901760
      %952 = vmatmul.mubr.f32.gmra.mrb[0].mxu0 %v951
      %v953 = vpop.f32.mrb[0].mxu0
      %v954 = vadd.f32 %v688, %v953
      %v955 = vpop.f32.mrb[0].mxu0
      %956 = vmatprep.mubr.f32.mxu0 0.0
      %v957 = vand.u32 %v309, 4294901760
      %958 = vmatmul.mubr.f32.gmra.mrb[0].mxu0 %v957
      %v959 = vpop.f32.mrb[0].mxu0
      %v960 = vadd.f32 %v698, %v959
      %v961 = vpop.f32.mrb[0].mxu0
      %962 = vdwg.mxu0
      %963 = vmatprep.subr.mxu0 0.0
      %v964 = vand.u32 %v313, 4294901760
      %v965 = vsub.f32 %v313, %v964
      %966 = vmatpush1.msra.mxu0 %v965
      %967 = vmatprep.subr.mxu0 0.0
      %968 = vmatpush1.msra.mxu0 0.0
      %969 = vmatprep.subr.mxu0 0.0
      %970 = vmatpush1.msra.mxu0 0.0
      %971 = vmatprep.subr.mxu0 0.0
      %972 = vmatpush1.msra.mxu0 0.0
      %973 = vmatprep.subr.mxu0 0.0
      %974 = vmatpush1.msra.mxu0 0.0
      %975 = vmatprep.subr.mxu0 0.0
      %976 = vmatpush1.msra.mxu0 0.0
      %977 = vmatprep.subr.mxu0 0.0
      %978 = vmatpush1.msra.mxu0 0.0
      %979 = vmatprep.subr.mxu0 0.0
      %980 = vmatpush1.msra.mxu0 0.0
      %981 = vmatprep.subr.mxu0 0.0
      %982 = vmatpush1.msra.mxu0 0.0
      %983 = vmatprep.subr.mxu0 0.0
      %984 = vmatpush1.msra.mxu0 0.0
      %985 = vmatprep.subr.mxu0 0.0
      %986 = vmatpush1.msra.mxu0 0.0
      %987 = vmatprep.subr.mxu0 0.0
      %988 = vmatpush1.msra.mxu0 0.0
      %989 = vmatprep.subr.mxu0 0.0
      %990 = vmatpush1.msra.mxu0 0.0
      %991 = vmatprep.subr.mxu0 0.0
      %992 = vmatpush1.msra.mxu0 0.0
      %993 = vmatprep.subr.mxu0 0.0
      %994 = vmatpush1.msra.mxu0 0.0
      %995 = vmatprep.subr.mxu0 0.0
      %996 = vmatpush1.msra.mxu0 0.0
      %997 = vmatprep.subr.mxu0 0.0
      %998 = vmatpush1.msra.mxu0 0.0
      %999 = vmatprep.subr.mxu0 0.0
      %1000 = vmatpush1.msra.mxu0 0.0
      %1001 = vmatprep.subr.mxu0 0.0
      %1002 = vmatpush1.msra.mxu0 0.0
      %1003 = vmatprep.subr.mxu0 0.0
      %1004 = vmatpush1.msra.mxu0 0.0
      %1005 = vmatprep.subr.mxu0 0.0
      %1006 = vmatpush1.msra.mxu0 0.0
      %1007 = vmatprep.subr.mxu0 0.0
      %1008 = vmatpush1.msra.mxu0 0.0
      %1009 = vmatprep.subr.mxu0 0.0
      %1010 = vmatpush1.msra.mxu0 0.0
      %1011 = vmatprep.subr.mxu0 0.0
      %1012 = vmatpush1.msra.mxu0 0.0
      %1013 = vmatprep.subr.mxu0 0.0
      %1014 = vmatpush1.msra.mxu0 0.0
      %1015 = vmatprep.subr.mxu0 0.0
      %1016 = vmatpush1.msra.mxu0 0.0
      %1017 = vmatprep.subr.mxu0 0.0
      %1018 = vmatpush1.msra.mxu0 0.0
      %1019 = vmatprep.subr.mxu0 0.0
      %1020 = vmatpush1.msra.mxu0 0.0
      %1021 = vmatprep.subr.mxu0 0.0
      %1022 = vmatpush1.msra.mxu0 0.0
      %1023 = vmatprep.subr.mxu0 0.0
      %1024 = vmatpush1.msra.mxu0 0.0
      %1025 = vmatprep.subr.mxu0 0.0
      %1026 = vmatpush1.msra.mxu0 0.0
      %1027 = vmatprep.subr.mxu0 0.0
      %1028 = vmatpush1.msra.mxu0 0.0
      %1029 = vmatprep.mubr.f32.mxu0 0.0
      %v1030 = vand.u32 %v216, 4294901760
      %v1031 = vsub.f32 %v216, %v1030
      %1032 = vmatmul.mubr.f32.gmra.mrb[0].mxu0 %v1031
      %v1033 = vpop.f32.mrb[0].mxu0
      %v1034 = vadd.f32 %v774, %v1033
      %v1035 = vpop.f32.mrb[0].mxu0
      %1036 = vmatprep.mubr.f32.mxu0 0.0
      %v1037 = vand.u32 %v219, 4294901760
      %v1038 = vsub.f32 %v219, %v1037
      %1039 = vmatmul.mubr.f32.gmra.mrb[0].mxu0 %v1038
      %v1040 = vpop.f32.mrb[0].mxu0
      %v1041 = vadd.f32 %v780, %v1040
      %v1042 = vpop.f32.mrb[0].mxu0
      %1043 = vmatprep.mubr.f32.mxu0 0.0
      %v1044 = vand.u32 %v222, 4294901760
      %v1045 = vsub.f32 %v222, %v1044
      %1046 = vmatmul.mubr.f32.gmra.mrb[0].mxu0 %v1045
      %v1047 = vpop.f32.mrb[0].mxu0
      %v1048 = vadd.f32 %v786, %v1047
      %v1049 = vpop.f32.mrb[0].mxu0
      %1050 = vmatprep.mubr.f32.mxu0 0.0
      %v1051 = vand.u32 %v225, 4294901760
      %v1052 = vsub.f32 %v225, %v1051
      %1053 = vmatmul.mubr.f32.gmra.mrb[0].mxu0 %v1052
      %v1054 = vpop.f32.mrb[0].mxu0
      %v1055 = vadd.f32 %v792, %v1054
      %v1056 = vpop.f32.mrb[0].mxu0
      %1057 = vmatprep.mubr.f32.mxu0 0.0
      %v1058 = vand.u32 %v228, 4294901760
      %v1059 = vsub.f32 %v228, %v1058
      %1060 = vmatmul.mubr.f32.gmra.mrb[0].mxu0 %v1059
      %v1061 = vpop.f32.mrb[0].mxu0
      %v1062 = vadd.f32 %v798, %v1061
      %v1063 = vpop.f32.mrb[0].mxu0
      %1064 = vmatprep.mubr.f32.mxu0 0.0
      %v1065 = vand.u32 %v231, 4294901760
      %v1066 = vsub.f32 %v231, %v1065
      %1067 = vmatmul.mubr.f32.gmra.mrb[0].mxu0 %v1066
      %v1068 = vpop.f32.mrb[0].mxu0
      %v1069 = vadd.f32 %v804, %v1068
      %v1070 = vpop.f32.mrb[0].mxu0
      %1071 = vmatprep.mubr.f32.mxu0 0.0
      %v1072 = vand.u32 %v234, 4294901760
      %v1073 = vsub.f32 %v234, %v1072
      %1074 = vmatmul.mubr.f32.gmra.mrb[0].mxu0 %v1073
      %v1075 = vpop.f32.mrb[0].mxu0
      %v1076 = vadd.f32 %v810, %v1075
      %v1077 = vpop.f32.mrb[0].mxu0
      %1078 = vmatprep.mubr.f32.mxu0 0.0
      %v1079 = vand.u32 %v237, 4294901760
      %v1080 = vsub.f32 %v237, %v1079
      %1081 = vmatmul.mubr.f32.gmra.mrb[0].mxu0 %v1080
      %v1082 = vpop.f32.mrb[0].mxu0
      %v1083 = vadd.f32 %v816, %v1082
      %v1084 = vpop.f32.mrb[0].mxu0
      %1085 = vmatprep.mubr.f32.mxu0 0.0
      %v1086 = vand.u32 %v240, 4294901760
      %v1087 = vsub.f32 %v240, %v1086
      %1088 = vmatmul.mubr.f32.gmra.mrb[0].mxu0 %v1087
      %v1089 = vpop.f32.mrb[0].mxu0
      %v1090 = vadd.f32 %v822, %v1089
      %v1091 = vpop.f32.mrb[0].mxu0
      %1092 = vmatprep.mubr.f32.mxu0 0.0
      %v1093 = vand.u32 %v243, 4294901760
      %v1094 = vsub.f32 %v243, %v1093
      %1095 = vmatmul.mubr.f32.gmra.mrb[0].mxu0 %v1094
      %v1096 = vpop.f32.mrb[0].mxu0
      %v1097 = vadd.f32 %v828, %v1096
      %v1098 = vpop.f32.mrb[0].mxu0
      %1099 = vmatprep.mubr.f32.mxu0 0.0
      %v1100 = vand.u32 %v246, 4294901760
      %v1101 = vsub.f32 %v246, %v1100
      %1102 = vmatmul.mubr.f32.gmra.mrb[0].mxu0 %v1101
      %v1103 = vpop.f32.mrb[0].mxu0
      %v1104 = vadd.f32 %v834, %v1103
      %v1105 = vpop.f32.mrb[0].mxu0
      %1106 = vmatprep.mubr.f32.mxu0 0.0
      %v1107 = vand.u32 %v249, 4294901760
      %v1108 = vsub.f32 %v249, %v1107
      %1109 = vmatmul.mubr.f32.gmra.mrb[0].mxu0 %v1108
      %v1110 = vpop.f32.mrb[0].mxu0
      %v1111 = vadd.f32 %v840, %v1110
      %v1112 = vpop.f32.mrb[0].mxu0
      %1113 = vmatprep.mubr.f32.mxu0 0.0
      %v1114 = vand.u32 %v252, 4294901760
      %v1115 = vsub.f32 %v252, %v1114
      %1116 = vmatmul.mubr.f32.gmra.mrb[0].mxu0 %v1115
      %v1117 = vpop.f32.mrb[0].mxu0
      %v1118 = vadd.f32 %v846, %v1117
      %v1119 = vpop.f32.mrb[0].mxu0
      %1120 = vmatprep.mubr.f32.mxu0 0.0
      %v1121 = vand.u32 %v255, 4294901760
      %v1122 = vsub.f32 %v255, %v1121
      %1123 = vmatmul.mubr.f32.gmra.mrb[0].mxu0 %v1122
      %v1124 = vpop.f32.mrb[0].mxu0
      %v1125 = vadd.f32 %v852, %v1124
      %v1126 = vpop.f32.mrb[0].mxu0
      %1127 = vmatprep.mubr.f32.mxu0 0.0
      %v1128 = vand.u32 %v258, 4294901760
      %v1129 = vsub.f32 %v258, %v1128
      %1130 = vmatmul.mubr.f32.gmra.mrb[0].mxu0 %v1129
      %v1131 = vpop.f32.mrb[0].mxu0
      %v1132 = vadd.f32 %v858, %v1131
      %v1133 = vpop.f32.mrb[0].mxu0
      %1134 = vmatprep.mubr.f32.mxu0 0.0
      %v1135 = vand.u32 %v261, 4294901760
      %v1136 = vsub.f32 %v261, %v1135
      %1137 = vmatmul.mubr.f32.gmra.mrb[0].mxu0 %v1136
      %v1138 = vpop.f32.mrb[0].mxu0
      %v1139 = vadd.f32 %v864, %v1138
      %v1140 = vpop.f32.mrb[0].mxu0
      %1141 = vmatprep.mubr.f32.mxu0 0.0
      %v1142 = vand.u32 %v264, 4294901760
      %v1143 = vsub.f32 %v264, %v1142
      %1144 = vmatmul.mubr.f32.gmra.mrb[0].mxu0 %v1143
      %v1145 = vpop.f32.mrb[0].mxu0
      %v1146 = vadd.f32 %v870, %v1145
      %v1147 = vpop.f32.mrb[0].mxu0
      %1148 = vmatprep.mubr.f32.mxu0 0.0
      %v1149 = vand.u32 %v267, 4294901760
      %v1150 = vsub.f32 %v267, %v1149
      %1151 = vmatmul.mubr.f32.gmra.mrb[0].mxu0 %v1150
      %v1152 = vpop.f32.mrb[0].mxu0
      %v1153 = vadd.f32 %v876, %v1152
      %v1154 = vpop.f32.mrb[0].mxu0
      %1155 = vmatprep.mubr.f32.mxu0 0.0
      %v1156 = vand.u32 %v270, 4294901760
      %v1157 = vsub.f32 %v270, %v1156
      %1158 = vmatmul.mubr.f32.gmra.mrb[0].mxu0 %v1157
      %v1159 = vpop.f32.mrb[0].mxu0
      %v1160 = vadd.f32 %v882, %v1159
      %v1161 = vpop.f32.mrb[0].mxu0
      %1162 = vmatprep.mubr.f32.mxu0 0.0
      %v1163 = vand.u32 %v273, 4294901760
      %v1164 = vsub.f32 %v273, %v1163
      %1165 = vmatmul.mubr.f32.gmra.mrb[0].mxu0 %v1164
      %v1166 = vpop.f32.mrb[0].mxu0
      %v1167 = vadd.f32 %v888, %v1166
      %v1168 = vpop.f32.mrb[0].mxu0
      %1169 = vmatprep.mubr.f32.mxu0 0.0
      %v1170 = vand.u32 %v276, 4294901760
      %v1171 = vsub.f32 %v276, %v1170
      %1172 = vmatmul.mubr.f32.gmra.mrb[0].mxu0 %v1171
      %v1173 = vpop.f32.mrb[0].mxu0
      %v1174 = vadd.f32 %v894, %v1173
      %v1175 = vpop.f32.mrb[0].mxu0
      %1176 = vmatprep.mubr.f32.mxu0 0.0
      %v1177 = vand.u32 %v279, 4294901760
      %v1178 = vsub.f32 %v279, %v1177
      %1179 = vmatmul.mubr.f32.gmra.mrb[0].mxu0 %v1178
      %v1180 = vpop.f32.mrb[0].mxu0
      %v1181 = vadd.f32 %v900, %v1180
      %v1182 = vpop.f32.mrb[0].mxu0
      %1183 = vmatprep.mubr.f32.mxu0 0.0
      %v1184 = vand.u32 %v282, 4294901760
      %v1185 = vsub.f32 %v282, %v1184
      %1186 = vmatmul.mubr.f32.gmra.mrb[0].mxu0 %v1185
      %v1187 = vpop.f32.mrb[0].mxu0
      %v1188 = vadd.f32 %v906, %v1187
      %v1189 = vpop.f32.mrb[0].mxu0
      %1190 = vmatprep.mubr.f32.mxu0 0.0
      %v1191 = vand.u32 %v285, 4294901760
      %v1192 = vsub.f32 %v285, %v1191
      %1193 = vmatmul.mubr.f32.gmra.mrb[0].mxu0 %v1192
      %v1194 = vpop.f32.mrb[0].mxu0
      %v1195 = vadd.f32 %v912, %v1194
      %v1196 = vpop.f32.mrb[0].mxu0
      %1197 = vmatprep.mubr.f32.mxu0 0.0
      %v1198 = vand.u32 %v288, 4294901760
      %v1199 = vsub.f32 %v288, %v1198
      %1200 = vmatmul.mubr.f32.gmra.mrb[0].mxu0 %v1199
      %v1201 = vpop.f32.mrb[0].mxu0
      %v1202 = vadd.f32 %v918, %v1201
      %v1203 = vpop.f32.mrb[0].mxu0
      %1204 = vmatprep.mubr.f32.mxu0 0.0
      %v1205 = vand.u32 %v291, 4294901760
      %v1206 = vsub.f32 %v291, %v1205
      %1207 = vmatmul.mubr.f32.gmra.mrb[0].mxu0 %v1206
      %v1208 = vpop.f32.mrb[0].mxu0
      %v1209 = vadd.f32 %v924, %v1208
      %v1210 = vpop.f32.mrb[0].mxu0
      %1211 = vmatprep.mubr.f32.mxu0 0.0
      %v1212 = vand.u32 %v294, 4294901760
      %v1213 = vsub.f32 %v294, %v1212
      %1214 = vmatmul.mubr.f32.gmra.mrb[0].mxu0 %v1213
      %v1215 = vpop.f32.mrb[0].mxu0
      %v1216 = vadd.f32 %v930, %v1215
      %v1217 = vpop.f32.mrb[0].mxu0
      %1218 = vmatprep.mubr.f32.mxu0 0.0
      %v1219 = vand.u32 %v297, 4294901760
      %v1220 = vsub.f32 %v297, %v1219
      %1221 = vmatmul.mubr.f32.gmra.mrb[0].mxu0 %v1220
      %v1222 = vpop.f32.mrb[0].mxu0
      %v1223 = vadd.f32 %v936, %v1222
      %v1224 = vpop.f32.mrb[0].mxu0
      %1225 = vmatprep.mubr.f32.mxu0 0.0
      %v1226 = vand.u32 %v300, 4294901760
      %v1227 = vsub.f32 %v300, %v1226
      %1228 = vmatmul.mubr.f32.gmra.mrb[0].mxu0 %v1227
      %v1229 = vpop.f32.mrb[0].mxu0
      %v1230 = vadd.f32 %v942, %v1229
      %v1231 = vpop.f32.mrb[0].mxu0
      %1232 = vmatprep.mubr.f32.mxu0 0.0
      %v1233 = vand.u32 %v303, 4294901760
      %v1234 = vsub.f32 %v303, %v1233
      %1235 = vmatmul.mubr.f32.gmra.mrb[0].mxu0 %v1234
      %v1236 = vpop.f32.mrb[0].mxu0
      %v1237 = vadd.f32 %v948, %v1236
      %v1238 = vpop.f32.mrb[0].mxu0
      %1239 = vmatprep.mubr.f32.mxu0 0.0
      %v1240 = vand.u32 %v306, 4294901760
      %v1241 = vsub.f32 %v306, %v1240
      %1242 = vmatmul.mubr.f32.gmra.mrb[0].mxu0 %v1241
      %v1243 = vpop.f32.mrb[0].mxu0
      %v1244 = vadd.f32 %v954, %v1243
      %v1245 = vpop.f32.mrb[0].mxu0
      %1246 = vmatprep.mubr.f32.mxu0 0.0
      %v1247 = vand.u32 %v309, 4294901760
      %v1248 = vsub.f32 %v309, %v1247
      %1249 = vmatmul.mubr.f32.gmra.mrb[0].mxu0 %v1248
      %v1250 = vpop.f32.mrb[0].mxu0
      %v1251 = vadd.f32 %v960, %v1250
      %v1252 = vpop.f32.mrb[0].mxu0
      %1253 = vdwg.mxu0
      %1254 = vmatprep.subr.mxu0 0.0
      %v1255 = vand.u32 %v313, 4294901760
      %1256 = vmatpush1.msra.mxu0 %v1255
      %1257 = vmatprep.subr.mxu0 0.0
      %1258 = vmatpush1.msra.mxu0 0.0
      %1259 = vmatprep.subr.mxu0 0.0
      %1260 = vmatpush1.msra.mxu0 0.0
      %1261 = vmatprep.subr.mxu0 0.0
      %1262 = vmatpush1.msra.mxu0 0.0
      %1263 = vmatprep.subr.mxu0 0.0
      %1264 = vmatpush1.msra.mxu0 0.0
      %1265 = vmatprep.subr.mxu0 0.0
      %1266 = vmatpush1.msra.mxu0 0.0
      %1267 = vmatprep.subr.mxu0 0.0
      %1268 = vmatpush1.msra.mxu0 0.0
      %1269 = vmatprep.subr.mxu0 0.0
      %1270 = vmatpush1.msra.mxu0 0.0
      %1271 = vmatprep.subr.mxu0 0.0
      %1272 = vmatpush1.msra.mxu0 0.0
      %1273 = vmatprep.subr.mxu0 0.0
      %1274 = vmatpush1.msra.mxu0 0.0
      %1275 = vmatprep.subr.mxu0 0.0
      %1276 = vmatpush1.msra.mxu0 0.0
      %1277 = vmatprep.subr.mxu0 0.0
      %1278 = vmatpush1.msra.mxu0 0.0
      %1279 = vmatprep.subr.mxu0 0.0
      %1280 = vmatpush1.msra.mxu0 0.0
      %1281 = vmatprep.subr.mxu0 0.0
      %1282 = vmatpush1.msra.mxu0 0.0
      %1283 = vmatprep.subr.mxu0 0.0
      %1284 = vmatpush1.msra.mxu0 0.0
      %1285 = vmatprep.subr.mxu0 0.0
      %1286 = vmatpush1.msra.mxu0 0.0
      %1287 = vmatprep.subr.mxu0 0.0
      %1288 = vmatpush1.msra.mxu0 0.0
      %1289 = vmatprep.subr.mxu0 0.0
      %1290 = vmatpush1.msra.mxu0 0.0
      %1291 = vmatprep.subr.mxu0 0.0
      %1292 = vmatpush1.msra.mxu0 0.0
      %1293 = vmatprep.subr.mxu0 0.0
      %1294 = vmatpush1.msra.mxu0 0.0
      %1295 = vmatprep.subr.mxu0 0.0
      %1296 = vmatpush1.msra.mxu0 0.0
      %1297 = vmatprep.subr.mxu0 0.0
      %1298 = vmatpush1.msra.mxu0 0.0
      %1299 = vmatprep.subr.mxu0 0.0
      %1300 = vmatpush1.msra.mxu0 0.0
      %1301 = vmatprep.subr.mxu0 0.0
      %1302 = vmatpush1.msra.mxu0 0.0
      %1303 = vmatprep.subr.mxu0 0.0
      %1304 = vmatpush1.msra.mxu0 0.0
      %1305 = vmatprep.subr.mxu0 0.0
      %1306 = vmatpush1.msra.mxu0 0.0
      %1307 = vmatprep.subr.mxu0 0.0
      %1308 = vmatpush1.msra.mxu0 0.0
      %1309 = vmatprep.subr.mxu0 0.0
      %1310 = vmatpush1.msra.mxu0 0.0
      %1311 = vmatprep.subr.mxu0 0.0
      %1312 = vmatpush1.msra.mxu0 0.0
      %1313 = vmatprep.subr.mxu0 0.0
      %1314 = vmatpush1.msra.mxu0 0.0
      %1315 = vmatprep.subr.mxu0 0.0
      %1316 = vmatpush1.msra.mxu0 0.0
      %1317 = vmatprep.subr.mxu0 0.0
      %1318 = vmatpush1.msra.mxu0 0.0
      %1319 = vmatprep.mubr.f32.mxu0 0.0
      %v1320 = vand.u32 %v216, 4294901760
      %v1321 = vsub.f32 %v216, %v1320
      %v1322 = vand.u32 %v1321, 4294901760
      %1323 = vmatmul.mubr.f32.gmra.mrb[0].mxu0 %v1322
      %v1324 = vpop.f32.mrb[0].mxu0
      %v1325 = vadd.f32 %v1034, %v1324
      %v1326 = vpop.f32.mrb[0].mxu0
      %1327 = vmatprep.mubr.f32.mxu0 0.0
      %v1328 = vand.u32 %v219, 4294901760
      %v1329 = vsub.f32 %v219, %v1328
      %v1330 = vand.u32 %v1329, 4294901760
      %1331 = vmatmul.mubr.f32.gmra.mrb[0].mxu0 %v1330
      %v1332 = vpop.f32.mrb[0].mxu0
      %v1333 = vadd.f32 %v1041, %v1332
      %v1334 = vpop.f32.mrb[0].mxu0
      %1335 = vmatprep.mubr.f32.mxu0 0.0
      %v1336 = vand.u32 %v222, 4294901760
      %v1337 = vsub.f32 %v222, %v1336
      %v1338 = vand.u32 %v1337, 4294901760
      %1339 = vmatmul.mubr.f32.gmra.mrb[0].mxu0 %v1338
      %v1340 = vpop.f32.mrb[0].mxu0
      %v1341 = vadd.f32 %v1048, %v1340
      %v1342 = vpop.f32.mrb[0].mxu0
      %1343 = vmatprep.mubr.f32.mxu0 0.0
      %v1344 = vand.u32 %v225, 4294901760
      %v1345 = vsub.f32 %v225, %v1344
      %v1346 = vand.u32 %v1345, 4294901760
      %1347 = vmatmul.mubr.f32.gmra.mrb[0].mxu0 %v1346
      %v1348 = vpop.f32.mrb[0].mxu0
      %v1349 = vadd.f32 %v1055, %v1348
      %v1350 = vpop.f32.mrb[0].mxu0
      %1351 = vmatprep.mubr.f32.mxu0 0.0
      %v1352 = vand.u32 %v228, 4294901760
      %v1353 = vsub.f32 %v228, %v1352
      %v1354 = vand.u32 %v1353, 4294901760
      %1355 = vmatmul.mubr.f32.gmra.mrb[0].mxu0 %v1354
      %v1356 = vpop.f32.mrb[0].mxu0
      %v1357 = vadd.f32 %v1062, %v1356
      %v1358 = vpop.f32.mrb[0].mxu0
      %1359 = vmatprep.mubr.f32.mxu0 0.0
      %v1360 = vand.u32 %v231, 4294901760
      %v1361 = vsub.f32 %v231, %v1360
      %v1362 = vand.u32 %v1361, 4294901760
      %1363 = vmatmul.mubr.f32.gmra.mrb[0].mxu0 %v1362
      %v1364 = vpop.f32.mrb[0].mxu0
      %v1365 = vadd.f32 %v1069, %v1364
      %v1366 = vpop.f32.mrb[0].mxu0
      %1367 = vmatprep.mubr.f32.mxu0 0.0
      %v1368 = vand.u32 %v234, 4294901760
      %v1369 = vsub.f32 %v234, %v1368
      %v1370 = vand.u32 %v1369, 4294901760
      %1371 = vmatmul.mubr.f32.gmra.mrb[0].mxu0 %v1370
      %v1372 = vpop.f32.mrb[0].mxu0
      %v1373 = vadd.f32 %v1076, %v1372
      %v1374 = vpop.f32.mrb[0].mxu0
      %1375 = vmatprep.mubr.f32.mxu0 0.0
      %v1376 = vand.u32 %v237, 4294901760
      %v1377 = vsub.f32 %v237, %v1376
      %v1378 = vand.u32 %v1377, 4294901760
      %1379 = vmatmul.mubr.f32.gmra.mrb[0].mxu0 %v1378
      %v1380 = vpop.f32.mrb[0].mxu0
      %v1381 = vadd.f32 %v1083, %v1380
      %v1382 = vpop.f32.mrb[0].mxu0
      %1383 = vmatprep.mubr.f32.mxu0 0.0
      %v1384 = vand.u32 %v240, 4294901760
      %v1385 = vsub.f32 %v240, %v1384
      %v1386 = vand.u32 %v1385, 4294901760
      %1387 = vmatmul.mubr.f32.gmra.mrb[0].mxu0 %v1386
      %v1388 = vpop.f32.mrb[0].mxu0
      %v1389 = vadd.f32 %v1090, %v1388
      %v1390 = vpop.f32.mrb[0].mxu0
      %1391 = vmatprep.mubr.f32.mxu0 0.0
      %v1392 = vand.u32 %v243, 4294901760
      %v1393 = vsub.f32 %v243, %v1392
      %v1394 = vand.u32 %v1393, 4294901760
      %1395 = vmatmul.mubr.f32.gmra.mrb[0].mxu0 %v1394
      %v1396 = vpop.f32.mrb[0].mxu0
      %v1397 = vadd.f32 %v1097, %v1396
      %v1398 = vpop.f32.mrb[0].mxu0
      %1399 = vmatprep.mubr.f32.mxu0 0.0
      %v1400 = vand.u32 %v246, 4294901760
      %v1401 = vsub.f32 %v246, %v1400
      %v1402 = vand.u32 %v1401, 4294901760
      %1403 = vmatmul.mubr.f32.gmra.mrb[0].mxu0 %v1402
      %v1404 = vpop.f32.mrb[0].mxu0
      %v1405 = vadd.f32 %v1104, %v1404
      %v1406 = vpop.f32.mrb[0].mxu0
      %1407 = vmatprep.mubr.f32.mxu0 0.0
      %v1408 = vand.u32 %v249, 4294901760
      %v1409 = vsub.f32 %v249, %v1408
      %v1410 = vand.u32 %v1409, 4294901760
      %1411 = vmatmul.mubr.f32.gmra.mrb[0].mxu0 %v1410
      %v1412 = vpop.f32.mrb[0].mxu0
      %v1413 = vadd.f32 %v1111, %v1412
      %v1414 = vpop.f32.mrb[0].mxu0
      %1415 = vmatprep.mubr.f32.mxu0 0.0
      %v1416 = vand.u32 %v252, 4294901760
      %v1417 = vsub.f32 %v252, %v1416
      %v1418 = vand.u32 %v1417, 4294901760
      %1419 = vmatmul.mubr.f32.gmra.mrb[0].mxu0 %v1418
      %v1420 = vpop.f32.mrb[0].mxu0
      %v1421 = vadd.f32 %v1118, %v1420
      %v1422 = vpop.f32.mrb[0].mxu0
      %1423 = vmatprep.mubr.f32.mxu0 0.0
      %v1424 = vand.u32 %v255, 4294901760
      %v1425 = vsub.f32 %v255, %v1424
      %v1426 = vand.u32 %v1425, 4294901760
      %1427 = vmatmul.mubr.f32.gmra.mrb[0].mxu0 %v1426
      %v1428 = vpop.f32.mrb[0].mxu0
      %v1429 = vadd.f32 %v1125, %v1428
      %v1430 = vpop.f32.mrb[0].mxu0
      %1431 = vmatprep.mubr.f32.mxu0 0.0
      %v1432 = vand.u32 %v258, 4294901760
      %v1433 = vsub.f32 %v258, %v1432
      %v1434 = vand.u32 %v1433, 4294901760
      %1435 = vmatmul.mubr.f32.gmra.mrb[0].mxu0 %v1434
      %v1436 = vpop.f32.mrb[0].mxu0
      %v1437 = vadd.f32 %v1132, %v1436
      %v1438 = vpop.f32.mrb[0].mxu0
      %1439 = vmatprep.mubr.f32.mxu0 0.0
      %v1440 = vand.u32 %v261, 4294901760
      %v1441 = vsub.f32 %v261, %v1440
      %v1442 = vand.u32 %v1441, 4294901760
      %1443 = vmatmul.mubr.f32.gmra.mrb[0].mxu0 %v1442
      %v1444 = vpop.f32.mrb[0].mxu0
      %v1445 = vadd.f32 %v1139, %v1444
      %v1446 = vpop.f32.mrb[0].mxu0
      %1447 = vmatprep.mubr.f32.mxu0 0.0
      %v1448 = vand.u32 %v264, 4294901760
      %v1449 = vsub.f32 %v264, %v1448
      %v1450 = vand.u32 %v1449, 4294901760
      %1451 = vmatmul.mubr.f32.gmra.mrb[0].mxu0 %v1450
      %v1452 = vpop.f32.mrb[0].mxu0
      %v1453 = vadd.f32 %v1146, %v1452
      %v1454 = vpop.f32.mrb[0].mxu0
      %1455 = vmatprep.mubr.f32.mxu0 0.0
      %v1456 = vand.u32 %v267, 4294901760
      %v1457 = vsub.f32 %v267, %v1456
      %v1458 = vand.u32 %v1457, 4294901760
      %1459 = vmatmul.mubr.f32.gmra.mrb[0].mxu0 %v1458
      %v1460 = vpop.f32.mrb[0].mxu0
      %v1461 = vadd.f32 %v1153, %v1460
      %v1462 = vpop.f32.mrb[0].mxu0
      %1463 = vmatprep.mubr.f32.mxu0 0.0
      %v1464 = vand.u32 %v270, 4294901760
      %v1465 = vsub.f32 %v270, %v1464
      %v1466 = vand.u32 %v1465, 4294901760
      %1467 = vmatmul.mubr.f32.gmra.mrb[0].mxu0 %v1466
      %v1468 = vpop.f32.mrb[0].mxu0
      %v1469 = vadd.f32 %v1160, %v1468
      %v1470 = vpop.f32.mrb[0].mxu0
      %1471 = vmatprep.mubr.f32.mxu0 0.0
      %v1472 = vand.u32 %v273, 4294901760
      %v1473 = vsub.f32 %v273, %v1472
      %v1474 = vand.u32 %v1473, 4294901760
      %1475 = vmatmul.mubr.f32.gmra.mrb[0].mxu0 %v1474
      %v1476 = vpop.f32.mrb[0].mxu0
      %v1477 = vadd.f32 %v1167, %v1476
      %v1478 = vpop.f32.mrb[0].mxu0
      %1479 = vmatprep.mubr.f32.mxu0 0.0
      %v1480 = vand.u32 %v276, 4294901760
      %v1481 = vsub.f32 %v276, %v1480
      %v1482 = vand.u32 %v1481, 4294901760
      %1483 = vmatmul.mubr.f32.gmra.mrb[0].mxu0 %v1482
      %v1484 = vpop.f32.mrb[0].mxu0
      %v1485 = vadd.f32 %v1174, %v1484
      %v1486 = vpop.f32.mrb[0].mxu0
      %1487 = vmatprep.mubr.f32.mxu0 0.0
      %v1488 = vand.u32 %v279, 4294901760
      %v1489 = vsub.f32 %v279, %v1488
      %v1490 = vand.u32 %v1489, 4294901760
      %1491 = vmatmul.mubr.f32.gmra.mrb[0].mxu0 %v1490
      %v1492 = vpop.f32.mrb[0].mxu0
      %v1493 = vadd.f32 %v1181, %v1492
      %v1494 = vpop.f32.mrb[0].mxu0
      %1495 = vmatprep.mubr.f32.mxu0 0.0
      %v1496 = vand.u32 %v282, 4294901760
      %v1497 = vsub.f32 %v282, %v1496
      %v1498 = vand.u32 %v1497, 4294901760
      %1499 = vmatmul.mubr.f32.gmra.mrb[0].mxu0 %v1498
      %v1500 = vpop.f32.mrb[0].mxu0
      %v1501 = vadd.f32 %v1188, %v1500
      %v1502 = vpop.f32.mrb[0].mxu0
      %1503 = vmatprep.mubr.f32.mxu0 0.0
      %v1504 = vand.u32 %v285, 4294901760
      %v1505 = vsub.f32 %v285, %v1504
      %v1506 = vand.u32 %v1505, 4294901760
      %1507 = vmatmul.mubr.f32.gmra.mrb[0].mxu0 %v1506
      %v1508 = vpop.f32.mrb[0].mxu0
      %v1509 = vadd.f32 %v1195, %v1508
      %v1510 = vpop.f32.mrb[0].mxu0
      %1511 = vmatprep.mubr.f32.mxu0 0.0
      %v1512 = vand.u32 %v288, 4294901760
      %v1513 = vsub.f32 %v288, %v1512
      %v1514 = vand.u32 %v1513, 4294901760
      %1515 = vmatmul.mubr.f32.gmra.mrb[0].mxu0 %v1514
      %v1516 = vpop.f32.mrb[0].mxu0
      %v1517 = vadd.f32 %v1202, %v1516
      %v1518 = vpop.f32.mrb[0].mxu0
      %1519 = vmatprep.mubr.f32.mxu0 0.0
      %v1520 = vand.u32 %v291, 4294901760
      %v1521 = vsub.f32 %v291, %v1520
      %v1522 = vand.u32 %v1521, 4294901760
      %1523 = vmatmul.mubr.f32.gmra.mrb[0].mxu0 %v1522
      %v1524 = vpop.f32.mrb[0].mxu0
      %v1525 = vadd.f32 %v1209, %v1524
      %v1526 = vpop.f32.mrb[0].mxu0
      %1527 = vmatprep.mubr.f32.mxu0 0.0
      %v1528 = vand.u32 %v294, 4294901760
      %v1529 = vsub.f32 %v294, %v1528
      %v1530 = vand.u32 %v1529, 4294901760
      %1531 = vmatmul.mubr.f32.gmra.mrb[0].mxu0 %v1530
      %v1532 = vpop.f32.mrb[0].mxu0
      %v1533 = vadd.f32 %v1216, %v1532
      %v1534 = vpop.f32.mrb[0].mxu0
      %1535 = vmatprep.mubr.f32.mxu0 0.0
      %v1536 = vand.u32 %v297, 4294901760
      %v1537 = vsub.f32 %v297, %v1536
      %v1538 = vand.u32 %v1537, 4294901760
      %1539 = vmatmul.mubr.f32.gmra.mrb[0].mxu0 %v1538
      %v1540 = vpop.f32.mrb[0].mxu0
      %v1541 = vadd.f32 %v1223, %v1540
      %v1542 = vpop.f32.mrb[0].mxu0
      %1543 = vmatprep.mubr.f32.mxu0 0.0
      %v1544 = vand.u32 %v300, 4294901760
      %v1545 = vsub.f32 %v300, %v1544
      %v1546 = vand.u32 %v1545, 4294901760
      %1547 = vmatmul.mubr.f32.gmra.mrb[0].mxu0 %v1546
      %v1548 = vpop.f32.mrb[0].mxu0
      %v1549 = vadd.f32 %v1230, %v1548
      %v1550 = vpop.f32.mrb[0].mxu0
      %1551 = vmatprep.mubr.f32.mxu0 0.0
      %v1552 = vand.u32 %v303, 4294901760
      %v1553 = vsub.f32 %v303, %v1552
      %v1554 = vand.u32 %v1553, 4294901760
      %1555 = vmatmul.mubr.f32.gmra.mrb[0].mxu0 %v1554
      %v1556 = vpop.f32.mrb[0].mxu0
      %v1557 = vadd.f32 %v1237, %v1556
      %v1558 = vpop.f32.mrb[0].mxu0
      %1559 = vmatprep.mubr.f32.mxu0 0.0
      %v1560 = vand.u32 %v306, 4294901760
      %v1561 = vsub.f32 %v306, %v1560
      %v1562 = vand.u32 %v1561, 4294901760
      %1563 = vmatmul.mubr.f32.gmra.mrb[0].mxu0 %v1562
      %v1564 = vpop.f32.mrb[0].mxu0
      %v1565 = vadd.f32 %v1244, %v1564
      %v1566 = vpop.f32.mrb[0].mxu0
      %1567 = vmatprep.mubr.f32.mxu0 0.0
      %v1568 = vand.u32 %v309, 4294901760
      %v1569 = vsub.f32 %v309, %v1568
      %v1570 = vand.u32 %v1569, 4294901760
      %1571 = vmatmul.mubr.f32.gmra.mrb[0].mxu0 %v1570
      %v1572 = vpop.f32.mrb[0].mxu0
      %v1573 = vadd.f32 %v1251, %v1572
      %v1574 = vpop.f32.mrb[0].mxu0
      %1575 = vdwg.mxu0
      %1576 = vmatprep.subr.mxu0 0.0
      %v1577 = vand.u32 %v313, 4294901760
      %v1578 = vsub.f32 %v313, %v1577
      %v1579 = vand.u32 %v1578, 4294901760
      %1580 = vmatpush1.msra.mxu0 %v1579
      %1581 = vmatprep.subr.mxu0 0.0
      %1582 = vmatpush1.msra.mxu0 0.0
      %1583 = vmatprep.subr.mxu0 0.0
      %1584 = vmatpush1.msra.mxu0 0.0
      %1585 = vmatprep.subr.mxu0 0.0
      %1586 = vmatpush1.msra.mxu0 0.0
      %1587 = vmatprep.subr.mxu0 0.0
      %1588 = vmatpush1.msra.mxu0 0.0
      %1589 = vmatprep.subr.mxu0 0.0
      %1590 = vmatpush1.msra.mxu0 0.0
      %1591 = vmatprep.subr.mxu0 0.0
      %1592 = vmatpush1.msra.mxu0 0.0
      %1593 = vmatprep.subr.mxu0 0.0
      %1594 = vmatpush1.msra.mxu0 0.0
      %1595 = vmatprep.subr.mxu0 0.0
      %1596 = vmatpush1.msra.mxu0 0.0
      %1597 = vmatprep.subr.mxu0 0.0
      %1598 = vmatpush1.msra.mxu0 0.0
      %1599 = vmatprep.subr.mxu0 0.0
      %1600 = vmatpush1.msra.mxu0 0.0
      %1601 = vmatprep.subr.mxu0 0.0
      %1602 = vmatpush1.msra.mxu0 0.0
      %1603 = vmatprep.subr.mxu0 0.0
      %1604 = vmatpush1.msra.mxu0 0.0
      %1605 = vmatprep.subr.mxu0 0.0
      %1606 = vmatpush1.msra.mxu0 0.0
      %1607 = vmatprep.subr.mxu0 0.0
      %1608 = vmatpush1.msra.mxu0 0.0
      %1609 = vmatprep.subr.mxu0 0.0
      %1610 = vmatpush1.msra.mxu0 0.0
      %1611 = vmatprep.subr.mxu0 0.0
      %1612 = vmatpush1.msra.mxu0 0.0
      %1613 = vmatprep.subr.mxu0 0.0
      %1614 = vmatpush1.msra.mxu0 0.0
      %1615 = vmatprep.subr.mxu0 0.0
      %1616 = vmatpush1.msra.mxu0 0.0
      %1617 = vmatprep.subr.mxu0 0.0
      %1618 = vmatpush1.msra.mxu0 0.0
      %1619 = vmatprep.subr.mxu0 0.0
      %1620 = vmatpush1.msra.mxu0 0.0
      %1621 = vmatprep.subr.mxu0 0.0
      %1622 = vmatpush1.msra.mxu0 0.0
      %1623 = vmatprep.subr.mxu0 0.0
      %1624 = vmatpush1.msra.mxu0 0.0
      %1625 = vmatprep.subr.mxu0 0.0
      %1626 = vmatpush1.msra.mxu0 0.0
      %1627 = vmatprep.subr.mxu0 0.0
      %1628 = vmatpush1.msra.mxu0 0.0
      %1629 = vmatprep.subr.mxu0 0.0
      %1630 = vmatpush1.msra.mxu0 0.0
      %1631 = vmatprep.subr.mxu0 0.0
      %1632 = vmatpush1.msra.mxu0 0.0
      %1633 = vmatprep.subr.mxu0 0.0
      %1634 = vmatpush1.msra.mxu0 0.0
      %1635 = vmatprep.subr.mxu0 0.0
      %1636 = vmatpush1.msra.mxu0 0.0
      %1637 = vmatprep.subr.mxu0 0.0
      %1638 = vmatpush1.msra.mxu0 0.0
      %1639 = vmatprep.subr.mxu0 0.0
      %1640 = vmatpush1.msra.mxu0 0.0
      %1641 = vmatprep.subr.mxu0 0.0
      %1642 = vmatpush1.msra.mxu0 0.0
      %1643 = vmatprep.mubr.f32.mxu0 0.0
      %v1644 = vand.u32 %v216, 4294901760
      %1645 = vmatmul.mubr.f32.gmra.mrb[0].mxu0 %v1644
      %v1646 = vpop.f32.mrb[0].mxu0
      %v1647 = vadd.f32 %v1325, %v1646
      %v1648 = vpop.f32.mrb[0].mxu0
      %1649 = vmatprep.mubr.f32.mxu0 0.0
      %v1650 = vand.u32 %v219, 4294901760
      %1651 = vmatmul.mubr.f32.gmra.mrb[0].mxu0 %v1650
      %v1652 = vpop.f32.mrb[0].mxu0
      %v1653 = vadd.f32 %v1333, %v1652
      %v1654 = vpop.f32.mrb[0].mxu0
      %1655 = vmatprep.mubr.f32.mxu0 0.0
      %v1656 = vand.u32 %v222, 4294901760
      %1657 = vmatmul.mubr.f32.gmra.mrb[0].mxu0 %v1656
      %v1658 = vpop.f32.mrb[0].mxu0
      %v1659 = vadd.f32 %v1341, %v1658
      %v1660 = vpop.f32.mrb[0].mxu0
      %1661 = vmatprep.mubr.f32.mxu0 0.0
      %v1662 = vand.u32 %v225, 4294901760
      %1663 = vmatmul.mubr.f32.gmra.mrb[0].mxu0 %v1662
      %v1664 = vpop.f32.mrb[0].mxu0
      %v1665 = vadd.f32 %v1349, %v1664
      %v1666 = vpop.f32.mrb[0].mxu0
      %1667 = vmatprep.mubr.f32.mxu0 0.0
      %v1668 = vand.u32 %v228, 4294901760
      %1669 = vmatmul.mubr.f32.gmra.mrb[0].mxu0 %v1668
      %v1670 = vpop.f32.mrb[0].mxu0
      %v1671 = vadd.f32 %v1357, %v1670
      %v1672 = vpop.f32.mrb[0].mxu0
      %1673 = vmatprep.mubr.f32.mxu0 0.0
      %v1674 = vand.u32 %v231, 4294901760
      %1675 = vmatmul.mubr.f32.gmra.mrb[0].mxu0 %v1674
      %v1676 = vpop.f32.mrb[0].mxu0
      %v1677 = vadd.f32 %v1365, %v1676
      %v1678 = vpop.f32.mrb[0].mxu0
      %1679 = vmatprep.mubr.f32.mxu0 0.0
      %v1680 = vand.u32 %v234, 4294901760
      %1681 = vmatmul.mubr.f32.gmra.mrb[0].mxu0 %v1680
      %v1682 = vpop.f32.mrb[0].mxu0
      %v1683 = vadd.f32 %v1373, %v1682
      %v1684 = vpop.f32.mrb[0].mxu0
      %1685 = vmatprep.mubr.f32.mxu0 0.0
      %v1686 = vand.u32 %v237, 4294901760
      %1687 = vmatmul.mubr.f32.gmra.mrb[0].mxu0 %v1686
      %v1688 = vpop.f32.mrb[0].mxu0
      %v1689 = vadd.f32 %v1381, %v1688
      %v1690 = vpop.f32.mrb[0].mxu0
      %1691 = vmatprep.mubr.f32.mxu0 0.0
      %v1692 = vand.u32 %v240, 4294901760
      %1693 = vmatmul.mubr.f32.gmra.mrb[0].mxu0 %v1692
      %v1694 = vpop.f32.mrb[0].mxu0
      %v1695 = vadd.f32 %v1389, %v1694
      %v1696 = vpop.f32.mrb[0].mxu0
      %1697 = vmatprep.mubr.f32.mxu0 0.0
      %v1698 = vand.u32 %v243, 4294901760
      %1699 = vmatmul.mubr.f32.gmra.mrb[0].mxu0 %v1698
      %v1700 = vpop.f32.mrb[0].mxu0
      %v1701 = vadd.f32 %v1397, %v1700
      %v1702 = vpop.f32.mrb[0].mxu0
      %1703 = vmatprep.mubr.f32.mxu0 0.0
      %v1704 = vand.u32 %v246, 4294901760
      %1705 = vmatmul.mubr.f32.gmra.mrb[0].mxu0 %v1704
      %v1706 = vpop.f32.mrb[0].mxu0
      %v1707 = vadd.f32 %v1405, %v1706
      %v1708 = vpop.f32.mrb[0].mxu0
      %1709 = vmatprep.mubr.f32.mxu0 0.0
      %v1710 = vand.u32 %v249, 4294901760
      %1711 = vmatmul.mubr.f32.gmra.mrb[0].mxu0 %v1710
      %v1712 = vpop.f32.mrb[0].mxu0
      %v1713 = vadd.f32 %v1413, %v1712
      %v1714 = vpop.f32.mrb[0].mxu0
      %1715 = vmatprep.mubr.f32.mxu0 0.0
      %v1716 = vand.u32 %v252, 4294901760
      %1717 = vmatmul.mubr.f32.gmra.mrb[0].mxu0 %v1716
      %v1718 = vpop.f32.mrb[0].mxu0
      %v1719 = vadd.f32 %v1421, %v1718
      %v1720 = vpop.f32.mrb[0].mxu0
      %1721 = vmatprep.mubr.f32.mxu0 0.0
      %v1722 = vand.u32 %v255, 4294901760
      %1723 = vmatmul.mubr.f32.gmra.mrb[0].mxu0 %v1722
      %v1724 = vpop.f32.mrb[0].mxu0
      %v1725 = vadd.f32 %v1429, %v1724
      %v1726 = vpop.f32.mrb[0].mxu0
      %1727 = vmatprep.mubr.f32.mxu0 0.0
      %v1728 = vand.u32 %v258, 4294901760
      %1729 = vmatmul.mubr.f32.gmra.mrb[0].mxu0 %v1728
      %v1730 = vpop.f32.mrb[0].mxu0
      %v1731 = vadd.f32 %v1437, %v1730
      %v1732 = vpop.f32.mrb[0].mxu0
      %1733 = vmatprep.mubr.f32.mxu0 0.0
      %v1734 = vand.u32 %v261, 4294901760
      %1735 = vmatmul.mubr.f32.gmra.mrb[0].mxu0 %v1734
      %v1736 = vpop.f32.mrb[0].mxu0
      %v1737 = vadd.f32 %v1445, %v1736
      %v1738 = vpop.f32.mrb[0].mxu0
      %1739 = vmatprep.mubr.f32.mxu0 0.0
      %v1740 = vand.u32 %v264, 4294901760
      %1741 = vmatmul.mubr.f32.gmra.mrb[0].mxu0 %v1740
      %v1742 = vpop.f32.mrb[0].mxu0
      %v1743 = vadd.f32 %v1453, %v1742
      %v1744 = vpop.f32.mrb[0].mxu0
      %1745 = vmatprep.mubr.f32.mxu0 0.0
      %v1746 = vand.u32 %v267, 4294901760
      %1747 = vmatmul.mubr.f32.gmra.mrb[0].mxu0 %v1746
      %v1748 = vpop.f32.mrb[0].mxu0
      %v1749 = vadd.f32 %v1461, %v1748
      %v1750 = vpop.f32.mrb[0].mxu0
      %1751 = vmatprep.mubr.f32.mxu0 0.0
      %v1752 = vand.u32 %v270, 4294901760
      %1753 = vmatmul.mubr.f32.gmra.mrb[0].mxu0 %v1752
      %v1754 = vpop.f32.mrb[0].mxu0
      %v1755 = vadd.f32 %v1469, %v1754
      %v1756 = vpop.f32.mrb[0].mxu0
      %1757 = vmatprep.mubr.f32.mxu0 0.0
      %v1758 = vand.u32 %v273, 4294901760
      %1759 = vmatmul.mubr.f32.gmra.mrb[0].mxu0 %v1758
      %v1760 = vpop.f32.mrb[0].mxu0
      %v1761 = vadd.f32 %v1477, %v1760
      %v1762 = vpop.f32.mrb[0].mxu0
      %1763 = vmatprep.mubr.f32.mxu0 0.0
      %v1764 = vand.u32 %v276, 4294901760
      %1765 = vmatmul.mubr.f32.gmra.mrb[0].mxu0 %v1764
      %v1766 = vpop.f32.mrb[0].mxu0
      %v1767 = vadd.f32 %v1485, %v1766
      %v1768 = vpop.f32.mrb[0].mxu0
      %1769 = vmatprep.mubr.f32.mxu0 0.0
      %v1770 = vand.u32 %v279, 4294901760
      %1771 = vmatmul.mubr.f32.gmra.mrb[0].mxu0 %v1770
      %v1772 = vpop.f32.mrb[0].mxu0
      %v1773 = vadd.f32 %v1493, %v1772
      %v1774 = vpop.f32.mrb[0].mxu0
      %1775 = vmatprep.mubr.f32.mxu0 0.0
      %v1776 = vand.u32 %v282, 4294901760
      %1777 = vmatmul.mubr.f32.gmra.mrb[0].mxu0 %v1776
      %v1778 = vpop.f32.mrb[0].mxu0
      %v1779 = vadd.f32 %v1501, %v1778
      %v1780 = vpop.f32.mrb[0].mxu0
      %1781 = vmatprep.mubr.f32.mxu0 0.0
      %v1782 = vand.u32 %v285, 4294901760
      %1783 = vmatmul.mubr.f32.gmra.mrb[0].mxu0 %v1782
      %v1784 = vpop.f32.mrb[0].mxu0
      %v1785 = vadd.f32 %v1509, %v1784
      %v1786 = vpop.f32.mrb[0].mxu0
      %1787 = vmatprep.mubr.f32.mxu0 0.0
      %v1788 = vand.u32 %v288, 4294901760
      %1789 = vmatmul.mubr.f32.gmra.mrb[0].mxu0 %v1788
      %v1790 = vpop.f32.mrb[0].mxu0
      %v1791 = vadd.f32 %v1517, %v1790
      %v1792 = vpop.f32.mrb[0].mxu0
      %1793 = vmatprep.mubr.f32.mxu0 0.0
      %v1794 = vand.u32 %v291, 4294901760
      %1795 = vmatmul.mubr.f32.gmra.mrb[0].mxu0 %v1794
      %v1796 = vpop.f32.mrb[0].mxu0
      %v1797 = vadd.f32 %v1525, %v1796
      %v1798 = vpop.f32.mrb[0].mxu0
      %1799 = vmatprep.mubr.f32.mxu0 0.0
      %v1800 = vand.u32 %v294, 4294901760
      %1801 = vmatmul.mubr.f32.gmra.mrb[0].mxu0 %v1800
      %v1802 = vpop.f32.mrb[0].mxu0
      %v1803 = vadd.f32 %v1533, %v1802
      %v1804 = vpop.f32.mrb[0].mxu0
      %1805 = vmatprep.mubr.f32.mxu0 0.0
      %v1806 = vand.u32 %v297, 4294901760
      %1807 = vmatmul.mubr.f32.gmra.mrb[0].mxu0 %v1806
      %v1808 = vpop.f32.mrb[0].mxu0
      %v1809 = vadd.f32 %v1541, %v1808
      %v1810 = vpop.f32.mrb[0].mxu0
      %1811 = vmatprep.mubr.f32.mxu0 0.0
      %v1812 = vand.u32 %v300, 4294901760
      %1813 = vmatmul.mubr.f32.gmra.mrb[0].mxu0 %v1812
      %v1814 = vpop.f32.mrb[0].mxu0
      %v1815 = vadd.f32 %v1549, %v1814
      %v1816 = vpop.f32.mrb[0].mxu0
      %1817 = vmatprep.mubr.f32.mxu0 0.0
      %v1818 = vand.u32 %v303, 4294901760
      %1819 = vmatmul.mubr.f32.gmra.mrb[0].mxu0 %v1818
      %v1820 = vpop.f32.mrb[0].mxu0
      %v1821 = vadd.f32 %v1557, %v1820
      %v1822 = vpop.f32.mrb[0].mxu0
      %1823 = vmatprep.mubr.f32.mxu0 0.0
      %v1824 = vand.u32 %v306, 4294901760
      %1825 = vmatmul.mubr.f32.gmra.mrb[0].mxu0 %v1824
      %v1826 = vpop.f32.mrb[0].mxu0
      %v1827 = vadd.f32 %v1565, %v1826
      %v1828 = vpop.f32.mrb[0].mxu0
      %1829 = vmatprep.mubr.f32.mxu0 0.0
      %v1830 = vand.u32 %v309, 4294901760
      %1831 = vmatmul.mubr.f32.gmra.mrb[0].mxu0 %v1830
      %v1832 = vpop.f32.mrb[0].mxu0
      %v1833 = vadd.f32 %v1573, %v1832
      %v1834 = vpop.f32.mrb[0].mxu0
      %1835 = vdwg.mxu0
      %1836 = vmatprep.subr.mxu0 0.0
      %v1837 = vand.u32 %v313, 4294901760
      %1838 = vmatpush1.msra.mxu0 %v1837
      %1839 = vmatprep.subr.mxu0 0.0
      %1840 = vmatpush1.msra.mxu0 0.0
      %1841 = vmatprep.subr.mxu0 0.0
      %1842 = vmatpush1.msra.mxu0 0.0
      %1843 = vmatprep.subr.mxu0 0.0
      %1844 = vmatpush1.msra.mxu0 0.0
      %1845 = vmatprep.subr.mxu0 0.0
      %1846 = vmatpush1.msra.mxu0 0.0
      %1847 = vmatprep.subr.mxu0 0.0
      %1848 = vmatpush1.msra.mxu0 0.0
      %1849 = vmatprep.subr.mxu0 0.0
      %1850 = vmatpush1.msra.mxu0 0.0
      %1851 = vmatprep.subr.mxu0 0.0
      %1852 = vmatpush1.msra.mxu0 0.0
      %1853 = vmatprep.subr.mxu0 0.0
      %1854 = vmatpush1.msra.mxu0 0.0
      %1855 = vmatprep.subr.mxu0 0.0
      %1856 = vmatpush1.msra.mxu0 0.0
      %1857 = vmatprep.subr.mxu0 0.0
      %1858 = vmatpush1.msra.mxu0 0.0
      %1859 = vmatprep.subr.mxu0 0.0
      %1860 = vmatpush1.msra.mxu0 0.0
      %1861 = vmatprep.subr.mxu0 0.0
      %1862 = vmatpush1.msra.mxu0 0.0
      %1863 = vmatprep.subr.mxu0 0.0
      %1864 = vmatpush1.msra.mxu0 0.0
      %1865 = vmatprep.subr.mxu0 0.0
      %1866 = vmatpush1.msra.mxu0 0.0
      %1867 = vmatprep.subr.mxu0 0.0
      %1868 = vmatpush1.msra.mxu0 0.0
      %1869 = vmatprep.subr.mxu0 0.0
      %1870 = vmatpush1.msra.mxu0 0.0
      %1871 = vmatprep.subr.mxu0 0.0
      %1872 = vmatpush1.msra.mxu0 0.0
      %1873 = vmatprep.subr.mxu0 0.0
      %1874 = vmatpush1.msra.mxu0 0.0
      %1875 = vmatprep.subr.mxu0 0.0
      %1876 = vmatpush1.msra.mxu0 0.0
      %1877 = vmatprep.subr.mxu0 0.0
      %1878 = vmatpush1.msra.mxu0 0.0
      %1879 = vmatprep.subr.mxu0 0.0
      %1880 = vmatpush1.msra.mxu0 0.0
      %1881 = vmatprep.subr.mxu0 0.0
      %1882 = vmatpush1.msra.mxu0 0.0
      %1883 = vmatprep.subr.mxu0 0.0
      %1884 = vmatpush1.msra.mxu0 0.0
      %1885 = vmatprep.subr.mxu0 0.0
      %1886 = vmatpush1.msra.mxu0 0.0
      %1887 = vmatprep.subr.mxu0 0.0
      %1888 = vmatpush1.msra.mxu0 0.0
      %1889 = vmatprep.subr.mxu0 0.0
      %1890 = vmatpush1.msra.mxu0 0.0
      %1891 = vmatprep.subr.mxu0 0.0
      %1892 = vmatpush1.msra.mxu0 0.0
      %1893 = vmatprep.subr.mxu0 0.0
      %1894 = vmatpush1.msra.mxu0 0.0
      %1895 = vmatprep.subr.mxu0 0.0
      %1896 = vmatpush1.msra.mxu0 0.0
      %1897 = vmatprep.subr.mxu0 0.0
      %1898 = vmatpush1.msra.mxu0 0.0
      %1899 = vmatprep.subr.mxu0 0.0
      %1900 = vmatpush1.msra.mxu0 0.0
      %1901 = vmatprep.mubr.f32.mxu0 0.0
      %v1902 = vand.u32 %v216, 4294901760
      %1903 = vmatmul.mubr.f32.gmra.mrb[0].mxu0 %v1902
      %v1904 = vpop.f32.mrb[0].mxu0
      %v1905 = vadd.f32 %v1647, %v1904
      %v1906 = vpop.f32.mrb[0].mxu0
      %1907 = vmatprep.mubr.f32.mxu0 0.0
      %v1908 = vand.u32 %v219, 4294901760
      %1909 = vmatmul.mubr.f32.gmra.mrb[0].mxu0 %v1908
      %v1910 = vpop.f32.mrb[0].mxu0
      %v1911 = vadd.f32 %v1653, %v1910
      %v1912 = vpop.f32.mrb[0].mxu0
      %1913 = vmatprep.mubr.f32.mxu0 0.0
      %v1914 = vand.u32 %v222, 4294901760
      %1915 = vmatmul.mubr.f32.gmra.mrb[0].mxu0 %v1914
      %v1916 = vpop.f32.mrb[0].mxu0
      %v1917 = vadd.f32 %v1659, %v1916
      %v1918 = vpop.f32.mrb[0].mxu0
      %1919 = vmatprep.mubr.f32.mxu0 0.0
      %v1920 = vand.u32 %v225, 4294901760
      %1921 = vmatmul.mubr.f32.gmra.mrb[0].mxu0 %v1920
      %v1922 = vpop.f32.mrb[0].mxu0
      %v1923 = vadd.f32 %v1665, %v1922
      %v1924 = vpop.f32.mrb[0].mxu0
      %1925 = vmatprep.mubr.f32.mxu0 0.0
      %v1926 = vand.u32 %v228, 4294901760
      %1927 = vmatmul.mubr.f32.gmra.mrb[0].mxu0 %v1926
      %v1928 = vpop.f32.mrb[0].mxu0
      %v1929 = vadd.f32 %v1671, %v1928
      %v1930 = vpop.f32.mrb[0].mxu0
      %1931 = vmatprep.mubr.f32.mxu0 0.0
      %v1932 = vand.u32 %v231, 4294901760
      %1933 = vmatmul.mubr.f32.gmra.mrb[0].mxu0 %v1932
      %v1934 = vpop.f32.mrb[0].mxu0
      %v1935 = vadd.f32 %v1677, %v1934
      %v1936 = vpop.f32.mrb[0].mxu0
      %1937 = vmatprep.mubr.f32.mxu0 0.0
      %v1938 = vand.u32 %v234, 4294901760
      %1939 = vmatmul.mubr.f32.gmra.mrb[0].mxu0 %v1938
      %v1940 = vpop.f32.mrb[0].mxu0
      %v1941 = vadd.f32 %v1683, %v1940
      %v1942 = vpop.f32.mrb[0].mxu0
      %1943 = vmatprep.mubr.f32.mxu0 0.0
      %v1944 = vand.u32 %v237, 4294901760
      %1945 = vmatmul.mubr.f32.gmra.mrb[0].mxu0 %v1944
      %v1946 = vpop.f32.mrb[0].mxu0
      %v1947 = vadd.f32 %v1689, %v1946
      %v1948 = vpop.f32.mrb[0].mxu0
      %1949 = vmatprep.mubr.f32.mxu0 0.0
      %v1950 = vand.u32 %v240, 4294901760
      %1951 = vmatmul.mubr.f32.gmra.mrb[0].mxu0 %v1950
      %v1952 = vpop.f32.mrb[0].mxu0
      %v1953 = vadd.f32 %v1695, %v1952
      %v1954 = vpop.f32.mrb[0].mxu0
      %1955 = vmatprep.mubr.f32.mxu0 0.0
      %v1956 = vand.u32 %v243, 4294901760
      %1957 = vmatmul.mubr.f32.gmra.mrb[0].mxu0 %v1956
      %v1958 = vpop.f32.mrb[0].mxu0
      %v1959 = vadd.f32 %v1701, %v1958
      %v1960 = vpop.f32.mrb[0].mxu0
      %1961 = vmatprep.mubr.f32.mxu0 0.0
      %v1962 = vand.u32 %v246, 4294901760
      %1963 = vmatmul.mubr.f32.gmra.mrb[0].mxu0 %v1962
      %v1964 = vpop.f32.mrb[0].mxu0
      %v1965 = vadd.f32 %v1707, %v1964
      %v1966 = vpop.f32.mrb[0].mxu0
      %1967 = vmatprep.mubr.f32.mxu0 0.0
      %v1968 = vand.u32 %v249, 4294901760
      %1969 = vmatmul.mubr.f32.gmra.mrb[0].mxu0 %v1968
      %v1970 = vpop.f32.mrb[0].mxu0
      %v1971 = vadd.f32 %v1713, %v1970
      %v1972 = vpop.f32.mrb[0].mxu0
      %1973 = vmatprep.mubr.f32.mxu0 0.0
      %v1974 = vand.u32 %v252, 4294901760
      %1975 = vmatmul.mubr.f32.gmra.mrb[0].mxu0 %v1974
      %v1976 = vpop.f32.mrb[0].mxu0
      %v1977 = vadd.f32 %v1719, %v1976
      %v1978 = vpop.f32.mrb[0].mxu0
      %1979 = vmatprep.mubr.f32.mxu0 0.0
      %v1980 = vand.u32 %v255, 4294901760
      %1981 = vmatmul.mubr.f32.gmra.mrb[0].mxu0 %v1980
      %v1982 = vpop.f32.mrb[0].mxu0
      %v1983 = vadd.f32 %v1725, %v1982
      %v1984 = vpop.f32.mrb[0].mxu0
      %1985 = vmatprep.mubr.f32.mxu0 0.0
      %v1986 = vand.u32 %v258, 4294901760
      %1987 = vmatmul.mubr.f32.gmra.mrb[0].mxu0 %v1986
      %v1988 = vpop.f32.mrb[0].mxu0
      %v1989 = vadd.f32 %v1731, %v1988
      %v1990 = vpop.f32.mrb[0].mxu0
      %1991 = vmatprep.mubr.f32.mxu0 0.0
      %v1992 = vand.u32 %v261, 4294901760
      %1993 = vmatmul.mubr.f32.gmra.mrb[0].mxu0 %v1992
      %v1994 = vpop.f32.mrb[0].mxu0
      %v1995 = vadd.f32 %v1737, %v1994
      %v1996 = vpop.f32.mrb[0].mxu0
      %1997 = vmatprep.mubr.f32.mxu0 0.0
      %v1998 = vand.u32 %v264, 4294901760
      %1999 = vmatmul.mubr.f32.gmra.mrb[0].mxu0 %v1998
      %v2000 = vpop.f32.mrb[0].mxu0
      %v2001 = vadd.f32 %v1743, %v2000
      %v2002 = vpop.f32.mrb[0].mxu0
      %2003 = vmatprep.mubr.f32.mxu0 0.0
      %v2004 = vand.u32 %v267, 4294901760
      %2005 = vmatmul.mubr.f32.gmra.mrb[0].mxu0 %v2004
      %v2006 = vpop.f32.mrb[0].mxu0
      %v2007 = vadd.f32 %v1749, %v2006
      %v2008 = vpop.f32.mrb[0].mxu0
      %2009 = vmatprep.mubr.f32.mxu0 0.0
      %v2010 = vand.u32 %v270, 4294901760
      %2011 = vmatmul.mubr.f32.gmra.mrb[0].mxu0 %v2010
      %v2012 = vpop.f32.mrb[0].mxu0
      %v2013 = vadd.f32 %v1755, %v2012
      %v2014 = vpop.f32.mrb[0].mxu0
      %2015 = vmatprep.mubr.f32.mxu0 0.0
      %v2016 = vand.u32 %v273, 4294901760
      %2017 = vmatmul.mubr.f32.gmra.mrb[0].mxu0 %v2016
      %v2018 = vpop.f32.mrb[0].mxu0
      %v2019 = vadd.f32 %v1761, %v2018
      %v2020 = vpop.f32.mrb[0].mxu0
      %2021 = vmatprep.mubr.f32.mxu0 0.0
      %v2022 = vand.u32 %v276, 4294901760
      %2023 = vmatmul.mubr.f32.gmra.mrb[0].mxu0 %v2022
      %v2024 = vpop.f32.mrb[0].mxu0
      %v2025 = vadd.f32 %v1767, %v2024
      %v2026 = vpop.f32.mrb[0].mxu0
      %2027 = vmatprep.mubr.f32.mxu0 0.0
      %v2028 = vand.u32 %v279, 4294901760
      %2029 = vmatmul.mubr.f32.gmra.mrb[0].mxu0 %v2028
      %v2030 = vpop.f32.mrb[0].mxu0
      %v2031 = vadd.f32 %v1773, %v2030
      %v2032 = vpop.f32.mrb[0].mxu0
      %2033 = vmatprep.mubr.f32.mxu0 0.0
      %v2034 = vand.u32 %v282, 4294901760
      %2035 = vmatmul.mubr.f32.gmra.mrb[0].mxu0 %v2034
      %v2036 = vpop.f32.mrb[0].mxu0
      %v2037 = vadd.f32 %v1779, %v2036
      %v2038 = vpop.f32.mrb[0].mxu0
      %2039 = vmatprep.mubr.f32.mxu0 0.0
      %v2040 = vand.u32 %v285, 4294901760
      %2041 = vmatmul.mubr.f32.gmra.mrb[0].mxu0 %v2040
      %v2042 = vpop.f32.mrb[0].mxu0
      %v2043 = vadd.f32 %v1785, %v2042
      %v2044 = vpop.f32.mrb[0].mxu0
      %2045 = vmatprep.mubr.f32.mxu0 0.0
      %v2046 = vand.u32 %v288, 4294901760
      %2047 = vmatmul.mubr.f32.gmra.mrb[0].mxu0 %v2046
      %v2048 = vpop.f32.mrb[0].mxu0
      %v2049 = vadd.f32 %v1791, %v2048
      %v2050 = vpop.f32.mrb[0].mxu0
      %2051 = vmatprep.mubr.f32.mxu0 0.0
      %v2052 = vand.u32 %v291, 4294901760
      %2053 = vmatmul.mubr.f32.gmra.mrb[0].mxu0 %v2052
      %v2054 = vpop.f32.mrb[0].mxu0
      %v2055 = vadd.f32 %v1797, %v2054
      %v2056 = vpop.f32.mrb[0].mxu0
      %2057 = vmatprep.mubr.f32.mxu0 0.0
      %v2058 = vand.u32 %v294, 4294901760
      %2059 = vmatmul.mubr.f32.gmra.mrb[0].mxu0 %v2058
      %v2060 = vpop.f32.mrb[0].mxu0
      %v2061 = vadd.f32 %v1803, %v2060
      %v2062 = vpop.f32.mrb[0].mxu0
      %2063 = vmatprep.mubr.f32.mxu0 0.0
      %v2064 = vand.u32 %v297, 4294901760
      %2065 = vmatmul.mubr.f32.gmra.mrb[0].mxu0 %v2064
      %v2066 = vpop.f32.mrb[0].mxu0
      %v2067 = vadd.f32 %v1809, %v2066
      %v2068 = vpop.f32.mrb[0].mxu0
      %2069 = vmatprep.mubr.f32.mxu0 0.0
      %v2070 = vand.u32 %v300, 4294901760
      %2071 = vmatmul.mubr.f32.gmra.mrb[0].mxu0 %v2070
      %v2072 = vpop.f32.mrb[0].mxu0
      %v2073 = vadd.f32 %v1815, %v2072
      %v2074 = vpop.f32.mrb[0].mxu0
      %2075 = vmatprep.mubr.f32.mxu0 0.0
      %v2076 = vand.u32 %v303, 4294901760
      %2077 = vmatmul.mubr.f32.gmra.mrb[0].mxu0 %v2076
      %v2078 = vpop.f32.mrb[0].mxu0
      %v2079 = vadd.f32 %v1821, %v2078
      %v2080 = vpop.f32.mrb[0].mxu0
      %2081 = vmatprep.mubr.f32.mxu0 0.0
      %v2082 = vand.u32 %v306, 4294901760
      %2083 = vmatmul.mubr.f32.gmra.mrb[0].mxu0 %v2082
      %v2084 = vpop.f32.mrb[0].mxu0
      %v2085 = vadd.f32 %v1827, %v2084
      %v2086 = vpop.f32.mrb[0].mxu0
      %2087 = vmatprep.mubr.f32.mxu0 0.0
      %v2088 = vand.u32 %v309, 4294901760
      %2089 = vmatmul.mubr.f32.gmra.mrb[0].mxu0 %v2088
      %v2090 = vpop.f32.mrb[0].mxu0
      %v2091 = vadd.f32 %v1833, %v2090
      %v2092 = vpop.f32.mrb[0].mxu0
      %2093 = vdwg.mxu0
      %vm2094 = vcmask 64512
      %2095 = vst.msk [vmem:[%s172] sm:$0xff] %vm2094, %v1905
      %2096 = vst.msk [vmem:[%s172 + $0x8] sm:$0xff] %vm2094, %v1911
      %2097 = vst.msk [vmem:[%s172 + $0x10] sm:$0xff] %vm2094, %v1917
      %2098 = vst.msk [vmem:[%s172 + $0x18] sm:$0xff] %vm2094, %v1923
      %2099 = vst.msk [vmem:[%s172 + $0x20] sm:$0xff] %vm2094, %v1929
      %2100 = vst.msk [vmem:[%s172 + $0x28] sm:$0xff] %vm2094, %v1935
      %2101 = vst.msk [vmem:[%s172 + $0x30] sm:$0xff] %vm2094, %v1941
      %2102 = vst.msk [vmem:[%s172 + $0x38] sm:$0xff] %vm2094, %v1947
      %2103 = vst.msk [vmem:[%s172 + $0x40] sm:$0xff] %vm2094, %v1953
      %2104 = vst.msk [vmem:[%s172 + $0x48] sm:$0xff] %vm2094, %v1959
      %2105 = vst.msk [vmem:[%s172 + $0x50] sm:$0xff] %vm2094, %v1965
      %2106 = vst.msk [vmem:[%s172 + $0x58] sm:$0xff] %vm2094, %v1971
      %2107 = vst.msk [vmem:[%s172 + $0x60] sm:$0xff] %vm2094, %v1977
      %2108 = vst.msk [vmem:[%s172 + $0x68] sm:$0xff] %vm2094, %v1983
      %2109 = vst.msk [vmem:[%s172 + $0x70] sm:$0xff] %vm2094, %v1989
      %2110 = vst.msk [vmem:[%s172 + $0x78] sm:$0xff] %vm2094, %v1995
      %2111 = vst.msk [vmem:[%s172 + $0x80] sm:$0xff] %vm2094, %v2001
      %2112 = vst.msk [vmem:[%s172 + $0x88] sm:$0xff] %vm2094, %v2007
      %2113 = vst.msk [vmem:[%s172 + $0x90] sm:$0xff] %vm2094, %v2013
      %2114 = vst.msk [vmem:[%s172 + $0x98] sm:$0xff] %vm2094, %v2019
      %2115 = vst.msk [vmem:[%s172 + $0xa0] sm:$0xff] %vm2094, %v2025
      %2116 = vst.msk [vmem:[%s172 + $0xa8] sm:$0xff] %vm2094, %v2031
      %2117 = vst.msk [vmem:[%s172 + $0xb0] sm:$0xff] %vm2094, %v2037
      %2118 = vst.msk [vmem:[%s172 + $0xb8] sm:$0xff] %vm2094, %v2043
      %2119 = vst.msk [vmem:[%s172 + $0xc0] sm:$0xff] %vm2094, %v2049
      %2120 = vst.msk [vmem:[%s172 + $0xc8] sm:$0xff] %vm2094, %v2055
      %2121 = vst.msk [vmem:[%s172 + $0xd0] sm:$0xff] %vm2094, %v2061
      %2122 = vst.msk [vmem:[%s172 + $0xd8] sm:$0xff] %vm2094, %v2067
      %2123 = vst.msk [vmem:[%s172 + $0xe0] sm:$0xff] %vm2094, %v2073
      %2124 = vst.msk [vmem:[%s172 + $0xe8] sm:$0xff] %vm2094, %v2079
      %2125 = vst.msk [vmem:[%s172 + $0xf0] sm:$0xff] %vm2094, %v2085
      %2126 = vst.msk [vmem:[%s172 + $0xf8] sm:$0xff] %vm2094, %v2091
      %s2127 = smul.u32 32, %s14
      %p2128 = scmp.lt.s32.totalorder %s2127, 63
      %s2129 = scalar_select %p2128, %s2127, 63
      %s2130 = smul.addr %s2129, 8
      %s2131 = scalar_lea.vmem %s3, %s2130
      // Predicated region
      $region33: #{tpu_custom_call.1} parent=31 // pred_check
        %p2132 = pneg %p100
      $region34: #{tpu_custom_call.1} parent=31 // pred_check_branch
        %2134 = sbr.rel (%p2132) target = $region36
      $region35: #{tpu_custom_call.1} parent=31 // pred_region
        %s2135 = smul.u32 32, %s14
      $region36: #{tpu_custom_call.1} parent=31 // pred_fallthru
        _
    $region32: #{tpu_custom_call.1} parent=5 // pred_fallthru
      _
    %p2136 = scmp.le.s32.totalorder 2, %s9
    // Predicated region
    $region37: #{tpu_custom_call.1} parent=5 // pred_check
      %p2137 = pneg %p2136
    $region38: #{tpu_custom_call.1} parent=5 // pred_check_branch
      %2139 = sbr.rel (%p2137) target = $region40
    $region39: #{tpu_custom_call.1} parent=5 // pred_region
      %s2140 = ssub.s32 %s9, 2
      // Predicated region
      $region41: #{tpu_custom_call.1} parent=39 // pred_check
        %p2141 = pneg %p106
      $region42: #{tpu_custom_call.1} parent=39 // pred_check_branch
        %2143 = sbr.rel (%p2141) target = $region44
      $region43: #{tpu_custom_call.1} parent=39 // pred_region
        %s2144 = smul.u32 32, %s15
        %p2145 = scmp.lt.s32.totalorder %s2144, 63
        %s2146 = scalar_select %p2145, %s2144, 63
        %s2147 = smul.addr %s2146, 8
        %s2148 = scalar_lea.vmem %s3, %s2147
      $region44: #{tpu_custom_call.1} parent=39 // pred_fallthru
        _
    $region40: #{tpu_custom_call.1} parent=5 // pred_fallthru
      _
  $region6: #{tpu_custom_call.1} parent=0 // loop_footer
    %s13 = sadd.s32 1, %s9
  $region7: #{tpu_custom_call.1} parent=0 // loop_footer_branch
    %8 = sbr.rel target = $region3
  $region8: #{tpu_custom_call.1} parent=0 // loop_exit
    _

</llo_original>
